<compile_context>
chip_gen: v7x
topology: tpu7x:2x2x1
jax: 0.10.0
libtpu: 0.0.40
codegen_flags: <defaults>
</compile_context>

<pallas_src>
import functools

import jax
import jax.numpy as jnp
from jax.experimental import pallas as pl
from jax.experimental.pallas import tpu as pltpu

GN_EPS = 1e-5     # nn.GroupNorm default eps
COL_EPS = 1e-9    # column renormalization eps from the module


def _overlap_attention_kernel(x_ref, ol_ref, wproj_ref, bproj_ref,
                              wt_ref, bt_ref, gamma_ref, beta_ref,
                              o_ref, *, c, c4, dot_dtype, approx_recip):
    """One batch element of the fused overlap-attention block (NCL layout, N on lanes)."""
    n = x_ref.shape[-1]

    # ---- fused q/k + v projection: ONE MXU matmul over the channel axis -------------------
    x_dot = x_ref[0].astype(dot_dtype)                                      # (C, N)
    proj = jnp.dot(wproj_ref[...].astype(dot_dtype), x_dot,
                   preferred_element_type=jnp.float32) + bproj_ref[...]     # (C4+C+8, N) f32
    xqk = proj[:c4, :]                          # (C4, N)  shared q/k features
    xv_aug = proj[c4:, :].astype(dot_dtype)     # (C+8, N) rows [0,C)=v_conv(x), row C = ones

    # ---- attention logits; overlap-score row scaling folded into the q operand ------------
    ol = ol_ref[0]                                            # (1, N) lane-dense
    q = (xqk * ol).astype(dot_dtype)                          # column i scaled by ol[i]
    k = xqk.astype(dot_dtype)
    att = jax.lax.dot_general(q, k, (((0,), (0,)), ((), ())),
                              preferred_element_type=jnp.float32)           # (N, N)

    # ---- row softmax: single N^2 elementwise pass, reciprocal on the EUP ------------------
    att = att - jnp.max(att, axis=-1, keepdims=True)
    e = jnp.exp(att)
    rinv = pl.reciprocal(jnp.sum(e, axis=-1, keepdims=True), approx=approx_recip)   # (N, 1)
    p = (e * rinv).astype(dot_dtype)                                        # (N, N)

    # ---- value application; the ones row of xv_aug yields the column sums on the MXU,
    #      so the column renorm is pulled out of the contraction onto the (C, N) result -----
    r = jnp.dot(xv_aug, p, preferred_element_type=jnp.float32)              # (C+8, N)
    colinv = pl.reciprocal(COL_EPS + r[c:c + 1, :], approx=approx_recip)    # (1, N)
    x_r = r[:c, :] * colinv                                                 # (C, N)

    # ---- trans_conv on the residual difference ---------------------------------------------
    t = jnp.dot(wt_ref[...].astype(dot_dtype),
                (x_ref[0] - x_r).astype(dot_dtype),
                preferred_element_type=jnp.float32) + bt_ref[...]           # (C, N) f32

    # ---- GroupNorm (32 channels / group), vectorized across groups + ReLU + skip ----------
    g = c // 32
    inv_cnt = 1.0 / float(32 * n)
    tg = t.reshape(g, 32, n)
    mean = jnp.sum(jnp.sum(tg, axis=2, keepdims=True), axis=1, keepdims=True) * inv_cnt
    centered = tg - mean
    var = jnp.sum(jnp.sum(centered * centered, axis=2, keepdims=True),
                  axis=1, keepdims=True) * inv_cnt
    tn = (centered * jax.lax.rsqrt(var + GN_EPS)).reshape(c, n)
    tn = tn * gamma_ref[...] + beta_ref[...]
    o_ref[0] = (x_ref[0] + jnp.maximum(tn, 0.0)).astype(o_ref.dtype)


def overlap_attention_pallas(x, ol_score, params, *, dot_dtype=jnp.bfloat16):
    """Fused OverlapAttentionBlock forward.

    Args:
      x: (B, C, N) float32, NCL layout (same as the PyTorch module).
      ol_score: (B, N) float32 or None.
      params: dict with 'wqk' (C//4, C) [shared q/k weight], 'wv' (C, C), 'bv' (C,),
              'wt' (C, C), 'bt' (C,), 'gamma' (C,), 'beta' (C,).
      dot_dtype: MXU operand dtype. bf16 (default) = fast path with f32 accumulation;
                 float32 = near-exact path used for the tight correctness check.

    Returns:
      (B, C, N) float32.
    """
    B, C, N = x.shape
    assert C % 32 == 0, "channels must be a multiple of 32 (GroupNorm + C//4 projection)"
    assert N % 128 == 0, "N must be a multiple of 128 for lane-dense blocks"
    C4 = C // 4

    if ol_score is None:
        ol3 = jnp.ones((B, 1, N), jnp.float32)      # identical to skipping the row scaling
    else:
        ol3 = ol_score.reshape(B, 1, N).astype(jnp.float32)

    # Pack [q/k weight ; v weight ; ones row ; zero pad] into one projection matrix so one MXU
    # matmul produces x_qk, x_v and (via the attention matmul) the attention column sums.
    R = C4 + C + 8                                  # multiple of 8 (sublane aligned slices)
    wproj = jnp.zeros((R, C), jnp.float32)
    wproj = wproj.at[:C4].set(params['wqk'].astype(jnp.float32))
    wproj = wproj.at[C4:C4 + C].set(params['wv'].astype(jnp.float32))
    bproj = jnp.zeros((R, 1), jnp.float32)
    bproj = bproj.at[C4:C4 + C, 0].set(params['bv'].astype(jnp.float32))
    bproj = bproj.at[C4 + C, 0].set(1.0)            # ones row -> attention column sums

    wproj = wproj.astype(dot_dtype)
    wt = params['wt'].astype(dot_dtype)
    bt = params['bt'].reshape(C, 1).astype(jnp.float32)
    gamma = params['gamma'].reshape(C, 1).astype(jnp.float32)
    beta = params['beta'].reshape(C, 1).astype(jnp.float32)

    def const2d(a):
        # full (small) parameter array, same block every grid step -> stays VMEM resident
        return pl.BlockSpec(a.shape, lambda b: (0, 0))

    in_specs = [
        pl.BlockSpec((1, C, N), lambda b: (b, 0, 0)),    # x        (lane-dense on N)
        pl.BlockSpec((1, 1, N), lambda b: (b, 0, 0)),    # ol_score (lane-dense row)
        const2d(wproj), const2d(bproj),
        const2d(wt), const2d(bt), const2d(gamma), const2d(beta),
    ]

    # Advisory cost for XLA's scheduler around the custom call.
    flops = 2 * B * (R * C * N + C4 * N * N + (C + 8) * N * N + C * C * N)
    transcendentals = B * (N * N + 3 * N)
    bytes_accessed = 4 * (2 * B * C * N + B * N + 2 * C * C + 8 * C)
    cost = pl.CostEstimate(flops=flops, transcendentals=transcendentals,
                           bytes_accessed=bytes_accessed)

    kernel = functools.partial(_overlap_attention_kernel, c=C, c4=C4,
                               dot_dtype=dot_dtype,
                               approx_recip=(dot_dtype != jnp.float32))

    return pl.pallas_call(
        kernel,
        out_shape=jax.ShapeDtypeStruct((B, C, N), jnp.float32),
        grid_spec=pltpu.PrefetchScalarGridSpec(
            num_scalar_prefetch=0,
            grid=(B,),
            in_specs=in_specs,
            out_specs=pl.BlockSpec((1, C, N), lambda b: (b, 0, 0)),
        ),
        compiler_params=pltpu.CompilerParams(
            dimension_semantics=("parallel",),
            vmem_limit_bytes=32 * 1024 * 1024),
        cost_estimate=cost,
    )(x.astype(jnp.float32), ol3, wproj, bproj, wt, bt, gamma, beta)


def init_params(key, C):
    """Deterministic synthetic parameters mirroring the PyTorch module's shapes."""
    kqk, kv, kbv, kt, kbt, kg, kb = jax.random.split(key, 7)
    inv = 1.0 / jnp.sqrt(C)
    # PyTorch Conv1d weight is (C_out, C_in, 1); stored here as (C_out, C_in).
    wqk = jax.random.normal(kqk, (C // 4, C), jnp.float32) * inv   # q_conv.weight == k_conv.weight
    wv = jax.random.normal(kv, (C, C), jnp.float32) * inv
    bv = 0.1 * jax.random.normal(kbv, (C,), jnp.float32)
    wt = jax.random.normal(kt, (C, C), jnp.float32) * inv
    bt = 0.1 * jax.random.normal(kbt, (C,), jnp.float32)
    gamma = 1.0 + 0.1 * jax.random.normal(kg, (C,), jnp.float32)   # GroupNorm affine
    beta = 0.1 * jax.random.normal(kb, (C,), jnp.float32)
    return dict(wqk=wqk, wv=wv, bv=bv, wt=wt, bt=bt, gamma=gamma, beta=beta)


def overlap_attention_reference(x, ol_score, params):
    """Plain-JAX reference of the same forward pass (full f32 matmul precision)."""
    hp = jax.lax.Precision.HIGHEST
    B, C, N = x.shape
    wqk, wv, bv = params['wqk'], params['wv'], params['bv']
    wt, bt = params['wt'], params['bt']
    gamma, beta = params['gamma'], params['beta']

    xqk = jnp.einsum('dc,bcn->bdn', wqk, x, precision=hp)          # shared q/k projection
    att = jnp.einsum('bdi,bdj->bij', xqk, xqk, precision=hp)       # (B, N, N)
    if ol_score is not None:
        att = ol_score[:, :, None] * att
    att = jax.nn.softmax(att, axis=-1)
    att = att / (COL_EPS + att.sum(axis=1, keepdims=True))
    xv = jnp.einsum('oc,bcn->bon', wv, x, precision=hp) + bv[None, :, None]
    x_r = jnp.einsum('bcn,bnm->bcm', xv, att, precision=hp)
    t = jnp.einsum('oc,bcn->bon', wt, x - x_r, precision=hp) + bt[None, :, None]
    G = C // 32
    tg = t.reshape(B, G, 32, N)
    mean = tg.mean(axis=(2, 3), keepdims=True)
    var = jnp.square(tg - mean).mean(axis=(2, 3), keepdims=True)
    tn = ((tg - mean) * jax.lax.rsqrt(var + GN_EPS)).reshape(B, C, N)
    tn = tn * gamma[None, :, None] + beta[None, :, None]
    return x + jnp.maximum(tn, 0.0)


if __name__ == "__main__":
    key = jax.random.PRNGKey(0)
    kx, ko, kp = jax.random.split(key, 3)

    B, C, N = 2, 64, 128   # channels multiple of 32, points multiple of 128
    x = jax.random.normal(kx, (B, C, N), jnp.float32)
    ol_score = jax.random.uniform(ko, (B, N), jnp.float32)
    params = init_params(kp, C)

    ref = jax.block_until_ready(overlap_attention_reference(x, ol_score, params))

    # Near-exact path (f32 MXU operands, exact reciprocals): tight semantic check.
    out_f32 = jax.block_until_ready(
        overlap_attention_pallas(x, ol_score, params, dot_dtype=jnp.float32))
    assert out_f32.shape == (B, C, N), out_f32.shape
    err32 = float(jnp.max(jnp.abs(out_f32 - ref)))
    assert jnp.allclose(out_f32, ref, atol=1e-3, rtol=1e-3), f"f32 path mismatch: {err32}"

    # Default fast path (bf16 MXU operands, EUP approx reciprocals): bf16-level tolerance.
    out_fast = jax.block_until_ready(overlap_attention_pallas(x, ol_score, params))
    errbf = float(jnp.max(jnp.abs(out_fast - ref)))
    assert jnp.allclose(out_fast, ref, atol=1e-1, rtol=1e-1), f"bf16 path mismatch: {errbf}"

    print("KERNEL_OK")
</pallas_src>

<mosaic_0001>
module attributes {stable_mosaic.version = 11 : i64} {
  func.func @_overlap_attention_kernel(%arg0: i32, %arg1: memref<1x64x128xf32, #tpu.memory_space<vmem>>, %arg2: memref<1x1x128xf32, #tpu.memory_space<vmem>>, %arg3: memref<88x64xf32, #tpu.memory_space<vmem>>, %arg4: memref<88x1xf32, #tpu.memory_space<vmem>>, %arg5: memref<64x64xf32, #tpu.memory_space<vmem>>, %arg6: memref<64x1xf32, #tpu.memory_space<vmem>>, %arg7: memref<64x1xf32, #tpu.memory_space<vmem>>, %arg8: memref<64x1xf32, #tpu.memory_space<vmem>>, %arg9: memref<1x64x128xf32, #tpu.memory_space<vmem>>) attributes {dimension_semantics = [#tpu.dimension_semantics<parallel>], iteration_bounds = array<i64: 2>, scalar_prefetch = 0 : i64, scratch_operands = 0 : i64, tpu.core_type = #tpu.core_type<tc>, window_params = [{transform_indices = @transform_0, window_bounds = array<i64: 1, 64, 128>}, {transform_indices = @transform_1, window_bounds = array<i64: 1, 1, 128>}, {pipeline_mode = #tpu.pipeline_mode<synchronous>, transform_indices = @transform_2, window_bounds = array<i64: 88, 64>}, {pipeline_mode = #tpu.pipeline_mode<synchronous>, transform_indices = @transform_3, window_bounds = array<i64: 88, 1>}, {pipeline_mode = #tpu.pipeline_mode<synchronous>, transform_indices = @transform_4, window_bounds = array<i64: 64, 64>}, {pipeline_mode = #tpu.pipeline_mode<synchronous>, transform_indices = @transform_5, window_bounds = array<i64: 64, 1>}, {pipeline_mode = #tpu.pipeline_mode<synchronous>, transform_indices = @transform_6, window_bounds = array<i64: 64, 1>}, {pipeline_mode = #tpu.pipeline_mode<synchronous>, transform_indices = @transform_7, window_bounds = array<i64: 64, 1>}, {transform_indices = @transform_8, window_bounds = array<i64: 1, 64, 128>}]} {
    %c0 = arith.constant 0 : index
    %c0_0 = arith.constant 0 : index
    %c0_1 = arith.constant 0 : index
    %0 = vector.load %arg1[%c0, %c0_0, %c0_1] : memref<1x64x128xf32, #tpu.memory_space<vmem>>, vector<1x64x128xf32>
    %1 = vector.shape_cast %0 : vector<1x64x128xf32> to vector<64x128xf32>
    %c0_2 = arith.constant 0 : index
    %c0_3 = arith.constant 0 : index
    %2 = vector.load %arg3[%c0_2, %c0_3] : memref<88x64xf32, #tpu.memory_space<vmem>>, vector<88x64xf32>
    %cst = arith.constant dense<0.000000e+00> : vector<88x128xf32>
    %3 = tpu.matmul %2, %1, %cst {dimension_numbers = #tpu.dot_dimension_numbers<[1], [0], [0], [1], [0, 0, 1, 1], [], []>} : vector<88x64xf32>, vector<64x128xf32>, vector<88x128xf32> -> vector<88x128xf32>
    %c0_4 = arith.constant 0 : index
    %c0_5 = arith.constant 0 : index
    %4 = vector.load %arg4[%c0_4, %c0_5] : memref<88x1xf32, #tpu.memory_space<vmem>>, vector<88x1xf32>
    %5 = vector.broadcast %4 : vector<88x1xf32> to vector<88x128xf32>
    %6 = arith.addf %3, %5 : vector<88x128xf32>
    %7 = vector.extract_strided_slice %6 {offsets = [0, 0], sizes = [16, 128], strides = [1, 1]} : vector<88x128xf32> to vector<16x128xf32>
    %8 = vector.extract_strided_slice %6 {offsets = [16, 0], sizes = [72, 128], strides = [1, 1]} : vector<88x128xf32> to vector<72x128xf32>
    %c0_6 = arith.constant 0 : index
    %c0_7 = arith.constant 0 : index
    %c0_8 = arith.constant 0 : index
    %9 = vector.load %arg2[%c0_6, %c0_7, %c0_8] : memref<1x1x128xf32, #tpu.memory_space<vmem>>, vector<1x1x128xf32>
    %10 = vector.shape_cast %9 : vector<1x1x128xf32> to vector<1x128xf32>
    %11 = vector.broadcast %10 : vector<1x128xf32> to vector<16x128xf32>
    %12 = arith.mulf %7, %11 : vector<16x128xf32>
    %cst_9 = arith.constant dense<0.000000e+00> : vector<128x128xf32>
    %13 = tpu.matmul %12, %7, %cst_9 {dimension_numbers = #tpu.dot_dimension_numbers<[0], [0], [1], [1], [0, 1, 1, 1], [], []>} : vector<16x128xf32>, vector<16x128xf32>, vector<128x128xf32> -> vector<128x128xf32>
    %cst_10 = arith.constant dense<0xFF800000> : vector<128xf32>
    %14 = vector.multi_reduction <maximumf>, %13, %cst_10 [1] : vector<128x128xf32> to vector<128xf32>
    %15 = vector.shape_cast %14 : vector<128xf32> to vector<128x1xf32>
    %16 = vector.broadcast %15 : vector<128x1xf32> to vector<128x128xf32>
    %17 = arith.subf %13, %16 : vector<128x128xf32>
    %18 = math.exp %17 : vector<128x128xf32>
    %cst_11 = arith.constant dense<0.000000e+00> : vector<128xf32>
    %19 = vector.multi_reduction <add>, %18, %cst_11 [1] : vector<128x128xf32> to vector<128xf32>
    %20 = vector.shape_cast %19 : vector<128xf32> to vector<128x1xf32>
    %21 = tpu.reciprocal %20 : vector<128x1xf32> -> vector<128x1xf32>
    %22 = vector.broadcast %21 : vector<128x1xf32> to vector<128x128xf32>
    %23 = arith.mulf %18, %22 : vector<128x128xf32>
    %cst_12 = arith.constant dense<0.000000e+00> : vector<72x128xf32>
    %24 = tpu.matmul %8, %23, %cst_12 {dimension_numbers = #tpu.dot_dimension_numbers<[1], [0], [0], [1], [0, 0, 1, 1], [], []>} : vector<72x128xf32>, vector<128x128xf32>, vector<72x128xf32> -> vector<72x128xf32>
    %25 = vector.extract_strided_slice %24 {offsets = [64, 0], sizes = [1, 128], strides = [1, 1]} : vector<72x128xf32> to vector<1x128xf32>
    %cst_13 = arith.constant 9.99999971E-10 : f32
    %26 = vector.broadcast %cst_13 : f32 to vector<1x128xf32>
    %27 = arith.addf %26, %25 : vector<1x128xf32>
    %28 = tpu.reciprocal %27 : vector<1x128xf32> -> vector<1x128xf32>
    %29 = vector.extract_strided_slice %24 {offsets = [0, 0], sizes = [64, 128], strides = [1, 1]} : vector<72x128xf32> to vector<64x128xf32>
    %30 = vector.broadcast %28 : vector<1x128xf32> to vector<64x128xf32>
    %31 = arith.mulf %29, %30 : vector<64x128xf32>
    %c0_14 = arith.constant 0 : index
    %c0_15 = arith.constant 0 : index
    %32 = vector.load %arg5[%c0_14, %c0_15] : memref<64x64xf32, #tpu.memory_space<vmem>>, vector<64x64xf32>
    %c0_16 = arith.constant 0 : index
    %c0_17 = arith.constant 0 : index
    %c0_18 = arith.constant 0 : index
    %33 = vector.load %arg1[%c0_16, %c0_17, %c0_18] : memref<1x64x128xf32, #tpu.memory_space<vmem>>, vector<1x64x128xf32>
    %34 = vector.shape_cast %33 : vector<1x64x128xf32> to vector<64x128xf32>
    %35 = arith.subf %34, %31 : vector<64x128xf32>
    %cst_19 = arith.constant dense<0.000000e+00> : vector<64x128xf32>
    %36 = tpu.matmul %32, %35, %cst_19 {dimension_numbers = #tpu.dot_dimension_numbers<[1], [0], [0], [1], [0, 0, 1, 1], [], []>} : vector<64x64xf32>, vector<64x128xf32>, vector<64x128xf32> -> vector<64x128xf32>
    %c0_20 = arith.constant 0 : index
    %c0_21 = arith.constant 0 : index
    %37 = vector.load %arg6[%c0_20, %c0_21] : memref<64x1xf32, #tpu.memory_space<vmem>>, vector<64x1xf32>
    %38 = vector.broadcast %37 : vector<64x1xf32> to vector<64x128xf32>
    %39 = arith.addf %36, %38 : vector<64x128xf32>
    %40 = vector.shape_cast %39 : vector<64x128xf32> to vector<2x32x128xf32>
    %cst_22 = arith.constant dense<0.000000e+00> : vector<2x32xf32>
    %41 = vector.multi_reduction <add>, %40, %cst_22 [2] : vector<2x32x128xf32> to vector<2x32xf32>
    %42 = vector.shape_cast %41 : vector<2x32xf32> to vector<2x32x1xf32>
    %cst_23 = arith.constant dense<0.000000e+00> : vector<2x1xf32>
    %43 = vector.multi_reduction <add>, %42, %cst_23 [1] : vector<2x32x1xf32> to vector<2x1xf32>
    %44 = vector.shape_cast %43 : vector<2x1xf32> to vector<2x1x1xf32>
    %cst_24 = arith.constant 2.44140625E-4 : f32
    %45 = vector.broadcast %cst_24 : f32 to vector<2x1x1xf32>
    %46 = arith.mulf %44, %45 : vector<2x1x1xf32>
    %47 = vector.broadcast %46 : vector<2x1x1xf32> to vector<2x32x128xf32>
    %48 = arith.subf %40, %47 : vector<2x32x128xf32>
    %49 = arith.mulf %48, %48 : vector<2x32x128xf32>
    %cst_25 = arith.constant dense<0.000000e+00> : vector<2x32xf32>
    %50 = vector.multi_reduction <add>, %49, %cst_25 [2] : vector<2x32x128xf32> to vector<2x32xf32>
    %51 = vector.shape_cast %50 : vector<2x32xf32> to vector<2x32x1xf32>
    %cst_26 = arith.constant dense<0.000000e+00> : vector<2x1xf32>
    %52 = vector.multi_reduction <add>, %51, %cst_26 [1] : vector<2x32x1xf32> to vector<2x1xf32>
    %53 = vector.shape_cast %52 : vector<2x1xf32> to vector<2x1x1xf32>
    %cst_27 = arith.constant 2.44140625E-4 : f32
    %54 = vector.broadcast %cst_27 : f32 to vector<2x1x1xf32>
    %55 = arith.mulf %53, %54 : vector<2x1x1xf32>
    %cst_28 = arith.constant 9.99999974E-6 : f32
    %56 = vector.broadcast %cst_28 : f32 to vector<2x1x1xf32>
    %57 = arith.addf %55, %56 : vector<2x1x1xf32>
    %58 = math.rsqrt %57 : vector<2x1x1xf32>
    %59 = vector.broadcast %58 : vector<2x1x1xf32> to vector<2x32x128xf32>
    %60 = arith.mulf %48, %59 : vector<2x32x128xf32>
    %61 = vector.shape_cast %60 : vector<2x32x128xf32> to vector<64x128xf32>
    %c0_29 = arith.constant 0 : index
    %c0_30 = arith.constant 0 : index
    %62 = vector.load %arg7[%c0_29, %c0_30] : memref<64x1xf32, #tpu.memory_space<vmem>>, vector<64x1xf32>
    %63 = vector.broadcast %62 : vector<64x1xf32> to vector<64x128xf32>
    %64 = arith.mulf %61, %63 : vector<64x128xf32>
    %c0_31 = arith.constant 0 : index
    %c0_32 = arith.constant 0 : index
    %65 = vector.load %arg8[%c0_31, %c0_32] : memref<64x1xf32, #tpu.memory_space<vmem>>, vector<64x1xf32>
    %66 = vector.broadcast %65 : vector<64x1xf32> to vector<64x128xf32>
    %67 = arith.addf %64, %66 : vector<64x128xf32>
    %c0_33 = arith.constant 0 : index
    %c0_34 = arith.constant 0 : index
    %c0_35 = arith.constant 0 : index
    %68 = vector.load %arg1[%c0_33, %c0_34, %c0_35] : memref<1x64x128xf32, #tpu.memory_space<vmem>>, vector<1x64x128xf32>
    %69 = vector.shape_cast %68 : vector<1x64x128xf32> to vector<64x128xf32>
    %cst_36 = arith.constant 0.000000e+00 : f32
    %70 = vector.broadcast %cst_36 : f32 to vector<64x128xf32>
    %71 = arith.maximumf %67, %70 : vector<64x128xf32>
    %72 = arith.addf %69, %71 : vector<64x128xf32>
    %c0_37 = arith.constant 0 : index
    %c0_38 = arith.constant 0 : index
    %c0_39 = arith.constant 0 : index
    %73 = vector.load %arg9[%c0_37, %c0_38, %c0_39] : memref<1x64x128xf32, #tpu.memory_space<vmem>>, vector<1x64x128xf32>
    %74 = vector.shape_cast %73 : vector<1x64x128xf32> to vector<64x128xf32>
    %75 = vector.shape_cast %72 : vector<64x128xf32> to vector<1x64x128xf32>
    tpu.vector_store %arg9[%c0_37, %c0_38, %c0_39], %75 {strides = array<i32>} : memref<1x64x128xf32, #tpu.memory_space<vmem>>, vector<1x64x128xf32>,
    return
  }
  func.func @transform_0(%arg0: i32) -> (i32, i32, i32) {
    %c0_i32 = arith.constant 0 : i32
    %c0_i32_0 = arith.constant 0 : i32
    %c0_i32_1 = arith.constant 0 : i32
    return %arg0, %c0_i32, %c0_i32_0 : i32, i32, i32
  }
  func.func @transform_1(%arg0: i32) -> (i32, i32, i32) {
    %c0_i32 = arith.constant 0 : i32
    %c0_i32_0 = arith.constant 0 : i32
    %c0_i32_1 = arith.constant 0 : i32
    return %arg0, %c0_i32, %c0_i32_0 : i32, i32, i32
  }
  func.func @transform_2(%arg0: i32) -> (i32, i32) {
    %c0_i32 = arith.constant 0 : i32
    %c0_i32_0 = arith.constant 0 : i32
    %c0_i32_1 = arith.constant 0 : i32
    return %c0_i32, %c0_i32_0 : i32, i32
  }
  func.func @transform_3(%arg0: i32) -> (i32, i32) {
    %c0_i32 = arith.constant 0 : i32
    %c0_i32_0 = arith.constant 0 : i32
    %c0_i32_1 = arith.constant 0 : i32
    return %c0_i32, %c0_i32_0 : i32, i32
  }
  func.func @transform_4(%arg0: i32) -> (i32, i32) {
    %c0_i32 = arith.constant 0 : i32
    %c0_i32_0 = arith.constant 0 : i32
    %c0_i32_1 = arith.constant 0 : i32
    return %c0_i32, %c0_i32_0 : i32, i32
  }
  func.func @transform_5(%arg0: i32) -> (i32, i32) {
    %c0_i32 = arith.constant 0 : i32
    %c0_i32_0 = arith.constant 0 : i32
    %c0_i32_1 = arith.constant 0 : i32
    return %c0_i32, %c0_i32_0 : i32, i32
  }
  func.func @transform_6(%arg0: i32) -> (i32, i32) {
    %c0_i32 = arith.constant 0 : i32
    %c0_i32_0 = arith.constant 0 : i32
    %c0_i32_1 = arith.constant 0 : i32
    return %c0_i32, %c0_i32_0 : i32, i32
  }
  func.func @transform_7(%arg0: i32) -> (i32, i32) {
    %c0_i32 = arith.constant 0 : i32
    %c0_i32_0 = arith.constant 0 : i32
    %c0_i32_1 = arith.constant 0 : i32
    return %c0_i32, %c0_i32_0 : i32, i32
  }
  func.func @transform_8(%arg0: i32) -> (i32, i32, i32) {
    %c0_i32 = arith.constant 0 : i32
    %c0_i32_0 = arith.constant 0 : i32
    %c0_i32_1 = arith.constant 0 : i32
    return %arg0, %c0_i32, %c0_i32_0 : i32, i32, i32
  }
}

</mosaic_0001>

<llo_original>
// kernel: tpu_custom_call.1
$region0: #{tpu_custom_call.1}
  #allocation0 [shape = 'u32[]', space=smem, size = 0x4, offset = 0x4, fixed_abs, tag = 'smem constant byte address 0x4 - core index']
  #allocation1 [shape = 'u32[144,128]{1,0:T(1,128)}', space=vmem, size = 0x12000, scoped, tag = 'internal scratch']
  %s0 = inlined_call_operand.vmem [shape: f32[2,64,128], index: 0, kind: input, shape index: {}]
  %s1 = inlined_call_operand.vmem [shape: f32[2,1,128], index: 1, kind: input, shape index: {}]
  %s2 = inlined_call_operand.vmem [shape: f32[88,64], index: 2, kind: input, shape index: {}]
  %s3 = inlined_call_operand.vmem [shape: f32[88,1], index: 3, kind: input, shape index: {}]
  %s4 = inlined_call_operand.vmem [shape: f32[64,64], index: 4, kind: input, shape index: {}]
  %s5 = inlined_call_operand.vmem [shape: f32[64,1], index: 5, kind: input, shape index: {}]
  %s6 = inlined_call_operand.vmem [shape: f32[64,1], index: 6, kind: input, shape index: {}]
  %s7 = inlined_call_operand.vmem [shape: f32[64,1], index: 7, kind: input, shape index: {}]
  %s8 = inlined_call_operand.hbm [shape: f32[2,64,128], index: 8, kind: output, shape index: {}]
  %s9 = sld [smem:[#allocation0]]
  $region65: #{tpu_custom_call.1} parent=0
    _
  %s11 = ssub.s32 1, %s9
  %s12 = scalar_select 0, %s11, %s9
  $region1: #{tpu_custom_call.1} parent=0
    #allocation2 [shape = 'u8[65536]{0}', space=vmem, size = 0x10000, scoped, tag = 'output window, operand 0']
    #allocation3 [shape = 's32[2]{0}', space=sflag, size = 0x8, scoped, tag = 'scoped memory for tpu_custom_call.1']
    %13 = vsyncpa [#allocation3], 0
    %s14 = scalar_lea.sflag [#allocation3], 1
    %15 = vsyncpa %s14, 0
    loop: start=0, step=1, limit=4
    $region2: #{tpu_custom_call.1} parent=1 // loop_pre_header
      _
    $region3: #{tpu_custom_call.1} parent=1 // loop_header
      %s17 = sphi 0, %s21
      %p18 = scmp.ge.s32.totalorder %s17, 4
      %s27 = sphi 0, %s29
      %s30 = sphi 0, %s27
      %s31 = sphi 0, %s30
      %s47 = sphi 0, %s31
      %s53 = sphi 0, %s55
      %s56 = sphi 0, %s53
      %s57 = sphi 0, %s56
      %s73 = sphi 0, %s57
      %s77 = sphi 0, %s77
      %s79 = sphi 0, %s77
      %s80 = sphi 0, %s79
      %s94 = sphi 0, %s80
      %s98 = sphi 0, %s98
      %s100 = sphi 0, %s98
      %s101 = sphi 0, %s100
      %s115 = sphi 0, %s101
      %s119 = sphi 0, %s119
      %s121 = sphi 0, %s119
      %s122 = sphi 0, %s121
      %s136 = sphi 0, %s122
      %s140 = sphi 0, %s140
      %s142 = sphi 0, %s140
      %s143 = sphi 0, %s142
      %s157 = sphi 0, %s143
      %s161 = sphi 0, %s161
      %s163 = sphi 0, %s161
      %s164 = sphi 0, %s163
      %s178 = sphi 0, %s164
      %s182 = sphi 0, %s182
      %s184 = sphi 0, %s182
      %s185 = sphi 0, %s184
      %s199 = sphi 0, %s185
      %s205 = sphi 0, %s207
      %s208 = sphi 0, %s205
      %s209 = sphi 0, %s208
      %s225 = sphi 0, %s209
    $region4: #{tpu_custom_call.1} parent=1 // loop_header_branch
      %20 = sbr.rel (%p18) target = $region8
    $region5: #{tpu_custom_call.1} parent=1 // loop_body
      %s22 = ssub.s32 %s17, 1
      %s23 = ssub.s32 %s17, 2
      %s24 = sadd.s32 %s17, 1
      %s25 = ssub.s32 %s17, %s24
      %p26 = scmp.eq.s32.totalorder %s25, 0
      %s28 = sadd.s32 %s27, 1
      %s29 = scalar_select %p26, %s27, %s28
      %p32 = pneg %p26
      %p33 = scmp.eq.s32.totalorder %s17, 1
      %p34 = por %p32, %p33
      %p35 = scmp.ne.s32.totalorder %s27, %s30
      %p36 = scmp.eq.s32.totalorder %s17, 0
      %p37 = por %p35, %p36
      %p38 = scmp.ne.s32.totalorder %s27, %s30
      %p39 = scmp.eq.s32.totalorder %s22, 1
      %p40 = por %p38, %p39
      %p41 = scmp.ne.s32.totalorder %s30, %s31
      %p42 = scmp.eq.s32.totalorder %s22, 0
      %p43 = por %p41, %p42
      %p44 = scmp.ne.s32.totalorder %s30, %s31
      %p45 = scmp.eq.s32.totalorder %s23, 1
      %p46 = por %p44, %p45
      %p48 = scmp.ne.s32.totalorder %s31, %s47
      %p49 = scmp.eq.s32.totalorder %s23, 0
      %p50 = por %p48, %p49
      %s51 = ssub.s32 %s17, %s24
      %p52 = scmp.eq.s32.totalorder %s51, 0
      %s54 = sadd.s32 %s53, 1
      %s55 = scalar_select %p52, %s53, %s54
      %p58 = pneg %p52
      %p59 = scmp.eq.s32.totalorder %s17, 1
      %p60 = por %p58, %p59
      %p61 = scmp.ne.s32.totalorder %s53, %s56
      %p62 = scmp.eq.s32.totalorder %s17, 0
      %p63 = por %p61, %p62
      %p64 = scmp.ne.s32.totalorder %s53, %s56
      %p65 = scmp.eq.s32.totalorder %s22, 1
      %p66 = por %p64, %p65
      %p67 = scmp.ne.s32.totalorder %s56, %s57
      %p68 = scmp.eq.s32.totalorder %s22, 0
      %p69 = por %p67, %p68
      %p70 = scmp.ne.s32.totalorder %s56, %s57
      %p71 = scmp.eq.s32.totalorder %s23, 1
      %p72 = por %p70, %p71
      %p74 = scmp.ne.s32.totalorder %s57, %s73
      %p75 = scmp.eq.s32.totalorder %s23, 0
      %p76 = por %p74, %p75
      %s78 = sadd.s32 %s77, 1
      %p81 = scmp.eq.s32.totalorder %s17, 1
      %p82 = scmp.ne.s32.totalorder %s77, %s79
      %p83 = scmp.eq.s32.totalorder %s17, 0
      %p84 = por %p82, %p83
      %p85 = scmp.ne.s32.totalorder %s77, %s79
      %p86 = scmp.eq.s32.totalorder %s22, 1
      %p87 = por %p85, %p86
      %p88 = scmp.ne.s32.totalorder %s79, %s80
      %p89 = scmp.eq.s32.totalorder %s22, 0
      %p90 = por %p88, %p89
      %p91 = scmp.ne.s32.totalorder %s79, %s80
      %p92 = scmp.eq.s32.totalorder %s23, 1
      %p93 = por %p91, %p92
      %p95 = scmp.ne.s32.totalorder %s80, %s94
      %p96 = scmp.eq.s32.totalorder %s23, 0
      %p97 = por %p95, %p96
      %s99 = sadd.s32 %s98, 1
      %p102 = scmp.eq.s32.totalorder %s17, 1
      %p103 = scmp.ne.s32.totalorder %s98, %s100
      %p104 = scmp.eq.s32.totalorder %s17, 0
      %p105 = por %p103, %p104
      %p106 = scmp.ne.s32.totalorder %s98, %s100
      %p107 = scmp.eq.s32.totalorder %s22, 1
      %p108 = por %p106, %p107
      %p109 = scmp.ne.s32.totalorder %s100, %s101
      %p110 = scmp.eq.s32.totalorder %s22, 0
      %p111 = por %p109, %p110
      %p112 = scmp.ne.s32.totalorder %s100, %s101
      %p113 = scmp.eq.s32.totalorder %s23, 1
      %p114 = por %p112, %p113
      %p116 = scmp.ne.s32.totalorder %s101, %s115
      %p117 = scmp.eq.s32.totalorder %s23, 0
      %p118 = por %p116, %p117
      %s120 = sadd.s32 %s119, 1
      %p123 = scmp.eq.s32.totalorder %s17, 1
      %p124 = scmp.ne.s32.totalorder %s119, %s121
      %p125 = scmp.eq.s32.totalorder %s17, 0
      %p126 = por %p124, %p125
      %p127 = scmp.ne.s32.totalorder %s119, %s121
      %p128 = scmp.eq.s32.totalorder %s22, 1
      %p129 = por %p127, %p128
      %p130 = scmp.ne.s32.totalorder %s121, %s122
      %p131 = scmp.eq.s32.totalorder %s22, 0
      %p132 = por %p130, %p131
      %p133 = scmp.ne.s32.totalorder %s121, %s122
      %p134 = scmp.eq.s32.totalorder %s23, 1
      %p135 = por %p133, %p134
      %p137 = scmp.ne.s32.totalorder %s122, %s136
      %p138 = scmp.eq.s32.totalorder %s23, 0
      %p139 = por %p137, %p138
      %s141 = sadd.s32 %s140, 1
      %p144 = scmp.eq.s32.totalorder %s17, 1
      %p145 = scmp.ne.s32.totalorder %s140, %s142
      %p146 = scmp.eq.s32.totalorder %s17, 0
      %p147 = por %p145, %p146
      %p148 = scmp.ne.s32.totalorder %s140, %s142
      %p149 = scmp.eq.s32.totalorder %s22, 1
      %p150 = por %p148, %p149
      %p151 = scmp.ne.s32.totalorder %s142, %s143
      %p152 = scmp.eq.s32.totalorder %s22, 0
      %p153 = por %p151, %p152
      %p154 = scmp.ne.s32.totalorder %s142, %s143
      %p155 = scmp.eq.s32.totalorder %s23, 1
      %p156 = por %p154, %p155
      %p158 = scmp.ne.s32.totalorder %s143, %s157
      %p159 = scmp.eq.s32.totalorder %s23, 0
      %p160 = por %p158, %p159
      %s162 = sadd.s32 %s161, 1
      %p165 = scmp.eq.s32.totalorder %s17, 1
      %p166 = scmp.ne.s32.totalorder %s161, %s163
      %p167 = scmp.eq.s32.totalorder %s17, 0
      %p168 = por %p166, %p167
      %p169 = scmp.ne.s32.totalorder %s161, %s163
      %p170 = scmp.eq.s32.totalorder %s22, 1
      %p171 = por %p169, %p170
      %p172 = scmp.ne.s32.totalorder %s163, %s164
      %p173 = scmp.eq.s32.totalorder %s22, 0
      %p174 = por %p172, %p173
      %p175 = scmp.ne.s32.totalorder %s163, %s164
      %p176 = scmp.eq.s32.totalorder %s23, 1
      %p177 = por %p175, %p176
      %p179 = scmp.ne.s32.totalorder %s164, %s178
      %p180 = scmp.eq.s32.totalorder %s23, 0
      %p181 = por %p179, %p180
      %s183 = sadd.s32 %s182, 1
      %p186 = scmp.eq.s32.totalorder %s17, 1
      %p187 = scmp.ne.s32.totalorder %s182, %s184
      %p188 = scmp.eq.s32.totalorder %s17, 0
      %p189 = por %p187, %p188
      %p190 = scmp.ne.s32.totalorder %s182, %s184
      %p191 = scmp.eq.s32.totalorder %s22, 1
      %p192 = por %p190, %p191
      %p193 = scmp.ne.s32.totalorder %s184, %s185
      %p194 = scmp.eq.s32.totalorder %s22, 0
      %p195 = por %p193, %p194
      %p196 = scmp.ne.s32.totalorder %s184, %s185
      %p197 = scmp.eq.s32.totalorder %s23, 1
      %p198 = por %p196, %p197
      %p200 = scmp.ne.s32.totalorder %s185, %s199
      %p201 = scmp.eq.s32.totalorder %s23, 0
      %p202 = por %p200, %p201
      %s203 = ssub.s32 %s17, %s24
      %p204 = scmp.eq.s32.totalorder %s203, 0
      %s206 = sadd.s32 %s205, 1
      %s207 = scalar_select %p204, %s205, %s206
      %p210 = pneg %p204
      %p211 = scmp.eq.s32.totalorder %s17, 1
      %p212 = por %p210, %p211
      %p213 = scmp.ne.s32.totalorder %s205, %s208
      %p214 = scmp.eq.s32.totalorder %s17, 0
      %p215 = por %p213, %p214
      %p216 = scmp.ne.s32.totalorder %s205, %s208
      %p217 = scmp.eq.s32.totalorder %s22, 1
      %p218 = por %p216, %p217
      %p219 = scmp.ne.s32.totalorder %s208, %s209
      %p220 = scmp.eq.s32.totalorder %s22, 0
      %p221 = por %p219, %p220
      %p222 = scmp.ne.s32.totalorder %s208, %s209
      %p223 = scmp.eq.s32.totalorder %s23, 1
      %p224 = por %p222, %p223
      %p226 = scmp.ne.s32.totalorder %s209, %s225
      %p227 = scmp.eq.s32.totalorder %s23, 0
      %p228 = por %p226, %p227
      %p229 = scmp.le.s32.totalorder 1, %s17
      %p230 = scmp.lt.s32.totalorder %s17, 3
      %p231 = pnand %p229, %p230
      %p232 = pneg %p231
      // Predicated region
      $region9: #{tpu_custom_call.1} parent=5 // pred_check
        _
      $region10: #{tpu_custom_call.1} parent=5 // pred_check_branch
        %234 = sbr.rel (%p231) target = $region12
      $region11: #{tpu_custom_call.1} parent=5 // pred_region
        %s235 = ssub.s32 %s17, 1
        // Predicated region
        $region13: #{tpu_custom_call.1} parent=11 // pred_check
          %p236 = pneg %p90
        $region14: #{tpu_custom_call.1} parent=11 // pred_check_branch
          %238 = sbr.rel (%p236) target = $region16
        $region15: #{tpu_custom_call.1} parent=11 // pred_region
          _
        $region16: #{tpu_custom_call.1} parent=11 // pred_fallthru
          _
        // Predicated region
        $region17: #{tpu_custom_call.1} parent=11 // pred_check
          %p239 = pneg %p111
        $region18: #{tpu_custom_call.1} parent=11 // pred_check_branch
          %241 = sbr.rel (%p239) target = $region20
        $region19: #{tpu_custom_call.1} parent=11 // pred_region
          _
        $region20: #{tpu_custom_call.1} parent=11 // pred_fallthru
          _
        // Predicated region
        $region21: #{tpu_custom_call.1} parent=11 // pred_check
          %p242 = pneg %p132
        $region22: #{tpu_custom_call.1} parent=11 // pred_check_branch
          %244 = sbr.rel (%p242) target = $region24
        $region23: #{tpu_custom_call.1} parent=11 // pred_region
          _
        $region24: #{tpu_custom_call.1} parent=11 // pred_fallthru
          _
        // Predicated region
        $region25: #{tpu_custom_call.1} parent=11 // pred_check
          %p245 = pneg %p153
        $region26: #{tpu_custom_call.1} parent=11 // pred_check_branch
          %247 = sbr.rel (%p245) target = $region28
        $region27: #{tpu_custom_call.1} parent=11 // pred_region
          _
        $region28: #{tpu_custom_call.1} parent=11 // pred_fallthru
          _
        // Predicated region
        $region29: #{tpu_custom_call.1} parent=11 // pred_check
          %p248 = pneg %p174
        $region30: #{tpu_custom_call.1} parent=11 // pred_check_branch
          %250 = sbr.rel (%p248) target = $region32
        $region31: #{tpu_custom_call.1} parent=11 // pred_region
          _
        $region32: #{tpu_custom_call.1} parent=11 // pred_fallthru
          _
        // Predicated region
        $region33: #{tpu_custom_call.1} parent=11 // pred_check
          %p251 = pneg %p195
        $region34: #{tpu_custom_call.1} parent=11 // pred_check_branch
          %253 = sbr.rel (%p251) target = $region36
        $region35: #{tpu_custom_call.1} parent=11 // pred_region
          _
        $region36: #{tpu_custom_call.1} parent=11 // pred_fallthru
          _
      $region12: #{tpu_custom_call.1} parent=5 // pred_fallthru
        _
      %p254 = scmp.lt.s32.totalorder %s17, 2
      // Predicated region
      $region37: #{tpu_custom_call.1} parent=5 // pred_check
        %p255 = pneg %p254
      $region38: #{tpu_custom_call.1} parent=5 // pred_check_branch
        %257 = sbr.rel (%p255) target = $region40
      $region39: #{tpu_custom_call.1} parent=5 // pred_region
        // Predicated region
        $region41: #{tpu_custom_call.1} parent=39 // pred_check
          %p258 = pneg %p37
        $region42: #{tpu_custom_call.1} parent=39 // pred_check_branch
          %260 = sbr.rel (%p258) target = $region44
        $region43: #{tpu_custom_call.1} parent=39 // pred_region
          %p261 = scmp.lt.s32.totalorder %s17, 1
          %s262 = scalar_select %p261, %s17, 1
          %s263 = smul.addr %s262, 8
          %s264 = smul.addr %s263, 8
          %s265 = scalar_lea.vmem %s0, %s264
        $region44: #{tpu_custom_call.1} parent=39 // pred_fallthru
          _
        // Predicated region
        $region45: #{tpu_custom_call.1} parent=39 // pred_check
          %p266 = pneg %p63
        $region46: #{tpu_custom_call.1} parent=39 // pred_check_branch
          %268 = sbr.rel (%p266) target = $region48
        $region47: #{tpu_custom_call.1} parent=39 // pred_region
          %p269 = scmp.lt.s32.totalorder %s17, 1
          %s270 = scalar_select %p269, %s17, 1
          %s271 = scalar_lea.vmem %s1, %s270
        $region48: #{tpu_custom_call.1} parent=39 // pred_fallthru
          _
      $region40: #{tpu_custom_call.1} parent=5 // pred_fallthru
        _
      %p272 = scmp.le.s32.totalorder 1, %s17
      %p273 = scmp.lt.s32.totalorder %s17, 3
      %p274 = pnand %p272, %p273
      %p275 = pneg %p274
      // Predicated region
      $region49: #{tpu_custom_call.1} parent=5 // pred_check
        _
      $region50: #{tpu_custom_call.1} parent=5 // pred_check_branch
        %277 = sbr.rel (%p274) target = $region52
      $region51: #{tpu_custom_call.1} parent=5 // pred_region
        %s278 = ssub.s32 %s17, 1
        %p279 = scmp.lt.s32.totalorder %s22, 1
        %s280 = scalar_select %p279, %s22, 1
        %s281 = smul.addr %s280, 8
        %s282 = smul.addr %s281, 8
        %s283 = scalar_lea.vmem %s0, %s282
        %p284 = pneg %p43
        %p285 = pneg %p40
        %p286 = scmp.lt.s32.totalorder %s22, 1
        %s287 = scalar_select %p286, %s22, 1
        %s288 = scalar_lea.vmem %s1, %s287
        %p289 = pneg %p69
        %p290 = pneg %p66
        %p291 = pneg %p90
        %p292 = pneg %p87
        %p293 = pneg %p111
        %p294 = pneg %p108
        %p295 = pneg %p132
        %p296 = pneg %p129
        %p297 = pneg %p153
        %p298 = pneg %p150
        %p299 = pneg %p174
        %p300 = pneg %p171
        %p301 = pneg %p195
        %p302 = pneg %p192
        %p303 = pneg %p221
        %p304 = pneg %p218
        %s305 = sand.u32 %s208, 1
        %s306 = scalar_lea.sflag [#allocation3], %s305
        %s307 = sand.u32 %s208, 1
        %s308 = smul.addr %s307, 64
        %s309 = scalar_lea.vmem [#allocation2], %s308
        %p310 = scmp.lt.s32.totalorder %s22, 1
        %s311 = scalar_select %p310, %s22, 1
        %s312 = smul.addr %s311, 8
        %s313 = smul.addr %s312, 8
        %s314 = scalar_lea.vmem %s0, %s313
        %p315 = scmp.lt.s32.totalorder %s22, 1
        %s316 = scalar_select %p315, %s22, 1
        %s317 = scalar_lea.vmem %s1, %s316
        %v318 = vld [vmem:[%s314] sm:$0xff]
        %v319 = vld [vmem:[%s314 + $0x8] sm:$0xff]
        %v320 = vld [vmem:[%s314 + $0x10] sm:$0xff]
        %v321 = vld [vmem:[%s314 + $0x18] sm:$0xff]
        %v322 = vld [vmem:[%s314 + $0x20] sm:$0xff]
        %v323 = vld [vmem:[%s314 + $0x28] sm:$0xff]
        %v324 = vld [vmem:[%s314 + $0x30] sm:$0xff]
        %v325 = vld [vmem:[%s314 + $0x38] sm:$0xff]
        %v326 = vld [vmem:[%s2] sm:$0xff]
        %v327 = vld [vmem:[%s2 + $0x8] sm:$0xff]
        %v328 = vld [vmem:[%s2 + $0x10] sm:$0xff]
        %v329 = vld [vmem:[%s2 + $0x18] sm:$0xff]
        %v330 = vld [vmem:[%s2 + $0x20] sm:$0xff]
        %v331 = vld [vmem:[%s2 + $0x28] sm:$0xff]
        %v332 = vld [vmem:[%s2 + $0x30] sm:$0xff]
        %v333 = vld [vmem:[%s2 + $0x38] sm:$0xff]
        %v334 = vld [vmem:[%s2 + $0x40] sm:$0xff]
        %v335 = vld [vmem:[%s2 + $0x48] sm:$0xff]
        %v336 = vld [vmem:[%s2 + $0x50] sm:$0xff]
        %v337 = vld [vmem:[%s3] sm:$0xff]
        %v338 = vld [vmem:[%s3 + $0x8] sm:$0xff]
        %v339 = vld [vmem:[%s3 + $0x10] sm:$0xff]
        %v340 = vld [vmem:[%s3 + $0x18] sm:$0xff]
        %v341 = vld [vmem:[%s3 + $0x20] sm:$0xff]
        %v342 = vld [vmem:[%s3 + $0x28] sm:$0xff]
        %v343 = vld [vmem:[%s3 + $0x30] sm:$0xff]
        %v344 = vld [vmem:[%s3 + $0x38] sm:$0xff]
        %v345 = vld [vmem:[%s3 + $0x40] sm:$0xff]
        %v346 = vld [vmem:[%s3 + $0x48] sm:$0xff]
        %v347 = vld [vmem:[%s3 + $0x50] sm:$0xff]
        %349 = vset.pattern.permute.xlu0 0
        %350 = vperm.xlu0 %349, %v337
        %v351 = vpop.permute.xlu0 %350
        %354 = vset.pattern.permute.xlu0 0
        %355 = vperm.xlu0 %354, %v338
        %v356 = vpop.permute.xlu0 %355
        %359 = vset.pattern.permute.xlu0 0
        %360 = vperm.xlu0 %359, %v339
        %v361 = vpop.permute.xlu0 %360
        %364 = vset.pattern.permute.xlu0 0
        %365 = vperm.xlu0 %364, %v340
        %v366 = vpop.permute.xlu0 %365
        %369 = vset.pattern.permute.xlu0 0
        %370 = vperm.xlu0 %369, %v341
        %v371 = vpop.permute.xlu0 %370
        %374 = vset.pattern.permute.xlu0 0
        %375 = vperm.xlu0 %374, %v342
        %v376 = vpop.permute.xlu0 %375
        %379 = vset.pattern.permute.xlu0 0
        %380 = vperm.xlu0 %379, %v343
        %v381 = vpop.permute.xlu0 %380
        %384 = vset.pattern.permute.xlu0 0
        %385 = vperm.xlu0 %384, %v344
        %v386 = vpop.permute.xlu0 %385
        %389 = vset.pattern.permute.xlu0 0
        %390 = vperm.xlu0 %389, %v345
        %v391 = vpop.permute.xlu0 %390
        %394 = vset.pattern.permute.xlu0 0
        %395 = vperm.xlu0 %394, %v346
        %v396 = vpop.permute.xlu0 %395
        %399 = vset.pattern.permute.xlu0 0
        %400 = vperm.xlu0 %399, %v347
        %v401 = vpop.permute.xlu0 %400
        %vm403 = vcmask 523264
        %v405 = vsel %vm403, %v326, 0
        %v408 = vsel %vm403, %v327, 0
        %v411 = vsel %vm403, %v328, 0
        %v414 = vsel %vm403, %v329, 0
        %v417 = vsel %vm403, %v330, 0
        %v420 = vsel %vm403, %v331, 0
        %v423 = vsel %vm403, %v332, 0
        %v426 = vsel %vm403, %v333, 0
        %v429 = vsel %vm403, %v334, 0
        %v432 = vsel %vm403, %v335, 0
        %v435 = vsel %vm403, %v336, 0
        %437 = vmatprep.subr.mxu0 0.0
        %438 = vmatpush1.msra.mxu0 %v318
        %439 = vmatprep.subr.mxu0 0.0
        %440 = vmatpush1.msra.mxu0 %v319
        %441 = vmatprep.subr.mxu0 0.0
        %442 = vmatpush1.msra.mxu0 %v320
        %443 = vmatprep.subr.mxu0 0.0
        %444 = vmatpush1.msra.mxu0 %v321
        %445 = vmatprep.subr.mxu0 0.0
        %446 = vmatpush1.msra.mxu0 %v322
        %447 = vmatprep.subr.mxu0 0.0
        %448 = vmatpush1.msra.mxu0 %v323
        %449 = vmatprep.subr.mxu0 0.0
        %450 = vmatpush1.msra.mxu0 %v324
        %451 = vmatprep.subr.mxu0 0.0
        %452 = vmatpush1.msra.mxu0 %v325
        %453 = vmatprep.subr.mxu0 0.0
        %454 = vmatpush1.msra.mxu0 0.0
        %455 = vmatprep.subr.mxu0 0.0
        %456 = vmatpush1.msra.mxu0 0.0
        %457 = vmatprep.subr.mxu0 0.0
        %458 = vmatpush1.msra.mxu0 0.0
        %459 = vmatprep.subr.mxu0 0.0
        %460 = vmatpush1.msra.mxu0 0.0
        %461 = vmatprep.subr.mxu0 0.0
        %462 = vmatpush1.msra.mxu0 0.0
        %463 = vmatprep.subr.mxu0 0.0
        %464 = vmatpush1.msra.mxu0 0.0
        %465 = vmatprep.subr.mxu0 0.0
        %466 = vmatpush1.msra.mxu0 0.0
        %467 = vmatprep.subr.mxu0 0.0
        %468 = vmatpush1.msra.mxu0 0.0
        %469 = vmatprep.subr.mxu0 0.0
        %470 = vmatpush1.msra.mxu0 0.0
        %471 = vmatprep.subr.mxu0 0.0
        %472 = vmatpush1.msra.mxu0 0.0
        %473 = vmatprep.subr.mxu0 0.0
        %474 = vmatpush1.msra.mxu0 0.0
        %475 = vmatprep.subr.mxu0 0.0
        %476 = vmatpush1.msra.mxu0 0.0
        %477 = vmatprep.subr.mxu0 0.0
        %478 = vmatpush1.msra.mxu0 0.0
        %479 = vmatprep.subr.mxu0 0.0
        %480 = vmatpush1.msra.mxu0 0.0
        %481 = vmatprep.subr.mxu0 0.0
        %482 = vmatpush1.msra.mxu0 0.0
        %483 = vmatprep.subr.mxu0 0.0
        %484 = vmatpush1.msra.mxu0 0.0
        %485 = vmatprep.subr.mxu0 0.0
        %486 = vmatpush1.msra.mxu0 0.0
        %487 = vmatprep.subr.mxu0 0.0
        %488 = vmatpush1.msra.mxu0 0.0
        %489 = vmatprep.subr.mxu0 0.0
        %490 = vmatpush1.msra.mxu0 0.0
        %491 = vmatprep.subr.mxu0 0.0
        %492 = vmatpush1.msra.mxu0 0.0
        %493 = vmatprep.subr.mxu0 0.0
        %494 = vmatpush1.msra.mxu0 0.0
        %495 = vmatprep.subr.mxu0 0.0
        %496 = vmatpush1.msra.mxu0 0.0
        %497 = vmatprep.subr.mxu0 0.0
        %498 = vmatpush1.msra.mxu0 0.0
        %499 = vmatprep.subr.mxu0 0.0
        %500 = vmatpush1.msra.mxu0 0.0
        %501 = vmatprep.mubr.f32.mxu0 0.0
        %502 = vmatmul.mubr.f32.gmra.mrb[0].mxu0 %v405
        %v503 = vpop.f32.mrb[0].mxu0
        %v504 = vadd.f32 %v351, %v503
        %v505 = vpop.f32.mrb[0].mxu0
        %506 = vmatprep.mubr.f32.mxu0 0.0
        %507 = vmatmul.mubr.f32.gmra.mrb[0].mxu0 %v408
        %v508 = vpop.f32.mrb[0].mxu0
        %v509 = vadd.f32 %v356, %v508
        %v510 = vpop.f32.mrb[0].mxu0
        %511 = vmatprep.mubr.f32.mxu0 0.0
        %512 = vmatmul.mubr.f32.gmra.mrb[0].mxu0 %v411
        %v513 = vpop.f32.mrb[0].mxu0
        %v514 = vadd.f32 %v361, %v513
        %v515 = vpop.f32.mrb[0].mxu0
        %516 = vmatprep.mubr.f32.mxu0 0.0
        %517 = vmatmul.mubr.f32.gmra.mrb[0].mxu0 %v414
        %v518 = vpop.f32.mrb[0].mxu0
        %v519 = vadd.f32 %v366, %v518
        %v520 = vpop.f32.mrb[0].mxu0
        %521 = vmatprep.mubr.f32.mxu0 0.0
        %522 = vmatmul.mubr.f32.gmra.mrb[0].mxu0 %v417
        %v523 = vpop.f32.mrb[0].mxu0
        %v524 = vadd.f32 %v371, %v523
        %v525 = vpop.f32.mrb[0].mxu0
        %526 = vmatprep.mubr.f32.mxu0 0.0
        %527 = vmatmul.mubr.f32.gmra.mrb[0].mxu0 %v420
        %v528 = vpop.f32.mrb[0].mxu0
        %v529 = vadd.f32 %v376, %v528
        %v530 = vpop.f32.mrb[0].mxu0
        %531 = vmatprep.mubr.f32.mxu0 0.0
        %532 = vmatmul.mubr.f32.gmra.mrb[0].mxu0 %v423
        %v533 = vpop.f32.mrb[0].mxu0
        %v534 = vadd.f32 %v381, %v533
        %v535 = vpop.f32.mrb[0].mxu0
        %536 = vmatprep.mubr.f32.mxu0 0.0
        %537 = vmatmul.mubr.f32.gmra.mrb[0].mxu0 %v426
        %v538 = vpop.f32.mrb[0].mxu0
        %v539 = vadd.f32 %v386, %v538
        %v540 = vpop.f32.mrb[0].mxu0
        %541 = vmatprep.mubr.f32.mxu0 0.0
        %542 = vmatmul.mubr.f32.gmra.mrb[0].mxu0 %v429
        %v543 = vpop.f32.mrb[0].mxu0
        %v544 = vadd.f32 %v391, %v543
        %v545 = vpop.f32.mrb[0].mxu0
        %546 = vmatprep.mubr.f32.mxu0 0.0
        %547 = vmatmul.mubr.f32.gmra.mrb[0].mxu0 %v432
        %v548 = vpop.f32.mrb[0].mxu0
        %v549 = vadd.f32 %v396, %v548
        %v550 = vpop.f32.mrb[0].mxu0
        %551 = vmatprep.mubr.f32.mxu0 0.0
        %552 = vmatmul.mubr.f32.gmra.mrb[0].mxu0 %v435
        %v553 = vpop.f32.mrb[0].mxu0
        %v554 = vadd.f32 %v401, %v553
        %v555 = vpop.f32.mrb[0].mxu0
        %556 = vdwg.mxu0
        %v557 = vld [vmem:[%s317] sm:$0x1]
        %v559 = vlaneseq
        %v560 = vshrl.u32 %v559, 7
        %v561 = vsub.s32 0, %v560
        %v562 = vrot.slane %v557, %v561
        %v564 = vmul.f32 %v504, %v562
        %v565 = vmul.f32 %v509, %v562
        %566 = vxpose.xlu0.b32.start [1/16] %v564, 128
        %567 = vxpose.xlu0.b32.cont [2/16] %v565, 128
        %568 = vxpose.xlu0.b32.cont [3/16] 0.0, 128
        %569 = vxpose.xlu0.b32.cont [4/16] 0.0, 128
        %570 = vxpose.xlu0.b32.cont [5/16] 0.0, 128
        %571 = vxpose.xlu0.b32.cont [6/16] 0.0, 128
        %572 = vxpose.xlu0.b32.cont [7/16] 0.0, 128
        %573 = vxpose.xlu0.b32.cont [8/16] 0.0, 128
        %574 = vxpose.xlu0.b32.cont [9/16] 0.0, 128
        %575 = vxpose.xlu0.b32.cont [10/16] 0.0, 128
        %576 = vxpose.xlu0.b32.cont [11/16] 0.0, 128
        %577 = vxpose.xlu0.b32.cont [12/16] 0.0, 128
        %578 = vxpose.xlu0.b32.cont [13/16] 0.0, 128
        %579 = vxpose.xlu0.b32.cont [14/16] 0.0, 128
        %580 = vxpose.xlu0.b32.cont [15/16] 0.0, 128
        %581 = vxpose.xlu0.b32.end [16/16] 0.0, 128
        %v582 = vpop.trf.xlu0
        %v583 = vpop.trf.xlu0
        %v584 = vpop.trf.xlu0
        %v585 = vpop.trf.xlu0
        %v586 = vpop.trf.xlu0
        %v587 = vpop.trf.xlu0
        %v588 = vpop.trf.xlu0
        %v589 = vpop.trf.xlu0
        %v590 = vpop.trf.xlu0
        %v591 = vpop.trf.xlu0
        %v592 = vpop.trf.xlu0
        %v593 = vpop.trf.xlu0
        %v594 = vpop.trf.xlu0
        %v595 = vpop.trf.xlu0
        %v596 = vpop.trf.xlu0
        %v597 = vpop.trf.xlu0
        %vm598 = vcmask 130048
        %v600 = vsel %vm598, %v582, 0
        %v603 = vsel %vm598, %v583, 0
        %v606 = vsel %vm598, %v584, 0
        %v609 = vsel %vm598, %v585, 0
        %v612 = vsel %vm598, %v586, 0
        %v615 = vsel %vm598, %v587, 0
        %v618 = vsel %vm598, %v588, 0
        %v621 = vsel %vm598, %v589, 0
        %v624 = vsel %vm598, %v590, 0
        %v627 = vsel %vm598, %v591, 0
        %v630 = vsel %vm598, %v592, 0
        %v633 = vsel %vm598, %v593, 0
        %v636 = vsel %vm598, %v594, 0
        %v639 = vsel %vm598, %v595, 0
        %v642 = vsel %vm598, %v596, 0
        %v645 = vsel %vm598, %v597, 0
        %647 = vmatprep.subr.mxu0 0.0
        %648 = vmatpush1.msra.mxu0 %v504
        %649 = vmatprep.subr.mxu0 0.0
        %650 = vmatpush1.msra.mxu0 %v509
        %651 = vmatprep.subr.mxu0 0.0
        %652 = vmatpush1.msra.mxu0 0.0
        %653 = vmatprep.subr.mxu0 0.0
        %654 = vmatpush1.msra.mxu0 0.0
        %655 = vmatprep.subr.mxu0 0.0
        %656 = vmatpush1.msra.mxu0 0.0
        %657 = vmatprep.subr.mxu0 0.0
        %658 = vmatpush1.msra.mxu0 0.0
        %659 = vmatprep.subr.mxu0 0.0
        %660 = vmatpush1.msra.mxu0 0.0
        %661 = vmatprep.subr.mxu0 0.0
        %662 = vmatpush1.msra.mxu0 0.0
        %663 = vmatprep.subr.mxu0 0.0
        %664 = vmatpush1.msra.mxu0 0.0
        %665 = vmatprep.subr.mxu0 0.0
        %666 = vmatpush1.msra.mxu0 0.0
        %667 = vmatprep.subr.mxu0 0.0
        %668 = vmatpush1.msra.mxu0 0.0
        %669 = vmatprep.subr.mxu0 0.0
        %670 = vmatpush1.msra.mxu0 0.0
        %671 = vmatprep.subr.mxu0 0.0
        %672 = vmatpush1.msra.mxu0 0.0
        %673 = vmatprep.subr.mxu0 0.0
        %674 = vmatpush1.msra.mxu0 0.0
        %675 = vmatprep.subr.mxu0 0.0
        %676 = vmatpush1.msra.mxu0 0.0
        %677 = vmatprep.subr.mxu0 0.0
        %678 = vmatpush1.msra.mxu0 0.0
        %679 = vmatprep.subr.mxu0 0.0
        %680 = vmatpush1.msra.mxu0 0.0
        %681 = vmatprep.subr.mxu0 0.0
        %682 = vmatpush1.msra.mxu0 0.0
        %683 = vmatprep.subr.mxu0 0.0
        %684 = vmatpush1.msra.mxu0 0.0
        %685 = vmatprep.subr.mxu0 0.0
        %686 = vmatpush1.msra.mxu0 0.0
        %687 = vmatprep.subr.mxu0 0.0
        %688 = vmatpush1.msra.mxu0 0.0
        %689 = vmatprep.subr.mxu0 0.0
        %690 = vmatpush1.msra.mxu0 0.0
        %691 = vmatprep.subr.mxu0 0.0
        %692 = vmatpush1.msra.mxu0 0.0
        %693 = vmatprep.subr.mxu0 0.0
        %694 = vmatpush1.msra.mxu0 0.0
        %695 = vmatprep.subr.mxu0 0.0
        %696 = vmatpush1.msra.mxu0 0.0
        %697 = vmatprep.subr.mxu0 0.0
        %698 = vmatpush1.msra.mxu0 0.0
        %699 = vmatprep.subr.mxu0 0.0
        %700 = vmatpush1.msra.mxu0 0.0
        %701 = vmatprep.subr.mxu0 0.0
        %702 = vmatpush1.msra.mxu0 0.0
        %703 = vmatprep.subr.mxu0 0.0
        %704 = vmatpush1.msra.mxu0 0.0
        %705 = vmatprep.subr.mxu0 0.0
        %706 = vmatpush1.msra.mxu0 0.0
        %707 = vmatprep.subr.mxu0 0.0
        %708 = vmatpush1.msra.mxu0 0.0
        %709 = vmatprep.subr.mxu0 0.0
        %710 = vmatpush1.msra.mxu0 0.0
        %711 = vmatprep.mubr.f32.mxu0 0.0
        %712 = vmatmul.mubr.f32.gmra.mrb[0].mxu0 %v600
        %v713 = vpop.f32.mrb[0].mxu0
        %v714 = vadd.f32 0.0, %v713
        %v715 = vpop.f32.mrb[0].mxu0
        %716 = vmatprep.mubr.f32.mxu0 0.0
        %717 = vmatmul.mubr.f32.gmra.mrb[0].mxu0 %v603
        %v718 = vpop.f32.mrb[0].mxu0
        %v719 = vadd.f32 0.0, %v718
        %v720 = vpop.f32.mrb[0].mxu0
        %721 = vmatprep.mubr.f32.mxu0 0.0
        %722 = vmatmul.mubr.f32.gmra.mrb[0].mxu0 %v606
        %v723 = vpop.f32.mrb[0].mxu0
        %v724 = vadd.f32 0.0, %v723
        %v725 = vpop.f32.mrb[0].mxu0
        %726 = vmatprep.mubr.f32.mxu0 0.0
        %727 = vmatmul.mubr.f32.gmra.mrb[0].mxu0 %v609
        %v728 = vpop.f32.mrb[0].mxu0
        %v729 = vadd.f32 0.0, %v728
        %v730 = vpop.f32.mrb[0].mxu0
        %731 = vmatprep.mubr.f32.mxu0 0.0
        %732 = vmatmul.mubr.f32.gmra.mrb[0].mxu0 %v612
        %v733 = vpop.f32.mrb[0].mxu0
        %v734 = vadd.f32 0.0, %v733
        %v735 = vpop.f32.mrb[0].mxu0
        %736 = vmatprep.mubr.f32.mxu0 0.0
        %737 = vmatmul.mubr.f32.gmra.mrb[0].mxu0 %v615
        %v738 = vpop.f32.mrb[0].mxu0
        %v739 = vadd.f32 0.0, %v738
        %v740 = vpop.f32.mrb[0].mxu0
        %741 = vmatprep.mubr.f32.mxu0 0.0
        %742 = vmatmul.mubr.f32.gmra.mrb[0].mxu0 %v618
        %v743 = vpop.f32.mrb[0].mxu0
        %v744 = vadd.f32 0.0, %v743
        %v745 = vpop.f32.mrb[0].mxu0
        %746 = vmatprep.mubr.f32.mxu0 0.0
        %747 = vmatmul.mubr.f32.gmra.mrb[0].mxu0 %v621
        %v748 = vpop.f32.mrb[0].mxu0
        %v749 = vadd.f32 0.0, %v748
        %v750 = vpop.f32.mrb[0].mxu0
        %751 = vmatprep.mubr.f32.mxu0 0.0
        %752 = vmatmul.mubr.f32.gmra.mrb[0].mxu0 %v624
        %v753 = vpop.f32.mrb[0].mxu0
        %v754 = vadd.f32 0.0, %v753
        %v755 = vpop.f32.mrb[0].mxu0
        %756 = vmatprep.mubr.f32.mxu0 0.0
        %757 = vmatmul.mubr.f32.gmra.mrb[0].mxu0 %v627
        %v758 = vpop.f32.mrb[0].mxu0
        %v759 = vadd.f32 0.0, %v758
        %v760 = vpop.f32.mrb[0].mxu0
        %761 = vmatprep.mubr.f32.mxu0 0.0
        %762 = vmatmul.mubr.f32.gmra.mrb[0].mxu0 %v630
        %v763 = vpop.f32.mrb[0].mxu0
        %v764 = vadd.f32 0.0, %v763
        %v765 = vpop.f32.mrb[0].mxu0
        %766 = vmatprep.mubr.f32.mxu0 0.0
        %767 = vmatmul.mubr.f32.gmra.mrb[0].mxu0 %v633
        %v768 = vpop.f32.mrb[0].mxu0
        %v769 = vadd.f32 0.0, %v768
        %v770 = vpop.f32.mrb[0].mxu0
        %771 = vmatprep.mubr.f32.mxu0 0.0
        %772 = vmatmul.mubr.f32.gmra.mrb[0].mxu0 %v636
        %v773 = vpop.f32.mrb[0].mxu0
        %v774 = vadd.f32 0.0, %v773
        %v775 = vpop.f32.mrb[0].mxu0
        %776 = vmatprep.mubr.f32.mxu0 0.0
        %777 = vmatmul.mubr.f32.gmra.mrb[0].mxu0 %v639
        %v778 = vpop.f32.mrb[0].mxu0
        %v779 = vadd.f32 0.0, %v778
        %v780 = vpop.f32.mrb[0].mxu0
        %781 = vmatprep.mubr.f32.mxu0 0.0
        %782 = vmatmul.mubr.f32.gmra.mrb[0].mxu0 %v642
        %v783 = vpop.f32.mrb[0].mxu0
        %v784 = vadd.f32 0.0, %v783
        %v785 = vpop.f32.mrb[0].mxu0
        %786 = vmatprep.mubr.f32.mxu0 0.0
        %787 = vmatmul.mubr.f32.gmra.mrb[0].mxu0 %v645
        %v788 = vpop.f32.mrb[0].mxu0
        %v789 = vadd.f32 0.0, %v788
        %v790 = vpop.f32.mrb[0].mxu0
        %791 = vdwg.mxu0
        %792 = vmax.xlane.f32.xlu0 %v714
        %v793 = vpop.xlane.xlu0 %792
        %794 = vmax.xlane.f32.xlu0 %v719
        %v795 = vpop.xlane.xlu0 %794
        %796 = vmax.xlane.f32.xlu0 %v724
        %v797 = vpop.xlane.xlu0 %796
        %798 = vmax.xlane.f32.xlu0 %v729
        %v799 = vpop.xlane.xlu0 %798
        %800 = vmax.xlane.f32.xlu0 %v734
        %v801 = vpop.xlane.xlu0 %800
        %802 = vmax.xlane.f32.xlu0 %v739
        %v803 = vpop.xlane.xlu0 %802
        %804 = vmax.xlane.f32.xlu0 %v744
        %v805 = vpop.xlane.xlu0 %804
        %806 = vmax.xlane.f32.xlu0 %v749
        %v807 = vpop.xlane.xlu0 %806
        %808 = vmax.xlane.f32.xlu0 %v754
        %v809 = vpop.xlane.xlu0 %808
        %810 = vmax.xlane.f32.xlu0 %v759
        %v811 = vpop.xlane.xlu0 %810
        %812 = vmax.xlane.f32.xlu0 %v764
        %v813 = vpop.xlane.xlu0 %812
        %814 = vmax.xlane.f32.xlu0 %v769
        %v815 = vpop.xlane.xlu0 %814
        %816 = vmax.xlane.f32.xlu0 %v774
        %v817 = vpop.xlane.xlu0 %816
        %818 = vmax.xlane.f32.xlu0 %v779
        %v819 = vpop.xlane.xlu0 %818
        %820 = vmax.xlane.f32.xlu0 %v784
        %v821 = vpop.xlane.xlu0 %820
        %822 = vmax.xlane.f32.xlu0 %v789
        %v823 = vpop.xlane.xlu0 %822
        %v824 = vsub.f32 %v714, %v793
        %v825 = vsub.f32 %v719, %v795
        %v826 = vsub.f32 %v724, %v797
        %v827 = vsub.f32 %v729, %v799
        %v828 = vsub.f32 %v734, %v801
        %v829 = vsub.f32 %v739, %v803
        %v830 = vsub.f32 %v744, %v805
        %v831 = vsub.f32 %v749, %v807
        %v832 = vsub.f32 %v754, %v809
        %v833 = vsub.f32 %v759, %v811
        %v834 = vsub.f32 %v764, %v813
        %v835 = vsub.f32 %v769, %v815
        %v836 = vsub.f32 %v774, %v817
        %v837 = vsub.f32 %v779, %v819
        %v838 = vsub.f32 %v784, %v821
        %v839 = vsub.f32 %v789, %v823
        %v840 = vmul.f32 %v824, 1.442695
        %v841 = vpow.pop %v840
        %v842 = vmul.f32 %v825, 1.442695
        %v843 = vpow.pop %v842
        %v844 = vmul.f32 %v826, 1.442695
        %v845 = vpow.pop %v844
        %v846 = vmul.f32 %v827, 1.442695
        %v847 = vpow.pop %v846
        %v848 = vmul.f32 %v828, 1.442695
        %v849 = vpow.pop %v848
        %v850 = vmul.f32 %v829, 1.442695
        %v851 = vpow.pop %v850
        %v852 = vmul.f32 %v830, 1.442695
        %v853 = vpow.pop %v852
        %v854 = vmul.f32 %v831, 1.442695
        %v855 = vpow.pop %v854
        %v856 = vmul.f32 %v832, 1.442695
        %v857 = vpow.pop %v856
        %v858 = vmul.f32 %v833, 1.442695
        %v859 = vpow.pop %v858
        %v860 = vmul.f32 %v834, 1.442695
        %v861 = vpow.pop %v860
        %v862 = vmul.f32 %v835, 1.442695
        %v863 = vpow.pop %v862
        %v864 = vmul.f32 %v836, 1.442695
        %v865 = vpow.pop %v864
        %v866 = vmul.f32 %v837, 1.442695
        %v867 = vpow.pop %v866
        %v868 = vmul.f32 %v838, 1.442695
        %v869 = vpow.pop %v868
        %v870 = vmul.f32 %v839, 1.442695
        %v871 = vpow.pop %v870
        %872 = vadd.xlane.f32.xlu0 %v841
        %v873 = vpop.xlane.xlu0 %872
        %874 = vadd.xlane.f32.xlu0 %v843
        %v875 = vpop.xlane.xlu0 %874
        %876 = vadd.xlane.f32.xlu0 %v845
        %v877 = vpop.xlane.xlu0 %876
        %878 = vadd.xlane.f32.xlu0 %v847
        %v879 = vpop.xlane.xlu0 %878
        %880 = vadd.xlane.f32.xlu0 %v849
        %v881 = vpop.xlane.xlu0 %880
        %882 = vadd.xlane.f32.xlu0 %v851
        %v883 = vpop.xlane.xlu0 %882
        %884 = vadd.xlane.f32.xlu0 %v853
        %v885 = vpop.xlane.xlu0 %884
        %886 = vadd.xlane.f32.xlu0 %v855
        %v887 = vpop.xlane.xlu0 %886
        %888 = vadd.xlane.f32.xlu0 %v857
        %v889 = vpop.xlane.xlu0 %888
        %890 = vadd.xlane.f32.xlu0 %v859
        %v891 = vpop.xlane.xlu0 %890
        %892 = vadd.xlane.f32.xlu0 %v861
        %v893 = vpop.xlane.xlu0 %892
        %894 = vadd.xlane.f32.xlu0 %v863
        %v895 = vpop.xlane.xlu0 %894
        %896 = vadd.xlane.f32.xlu0 %v865
        %v897 = vpop.xlane.xlu0 %896
        %898 = vadd.xlane.f32.xlu0 %v867
        %v899 = vpop.xlane.xlu0 %898
        %900 = vadd.xlane.f32.xlu0 %v869
        %v901 = vpop.xlane.xlu0 %900
        %902 = vadd.xlane.f32.xlu0 %v871
        %v903 = vpop.xlane.xlu0 %902
        %v904 = vrcp.pop %v873
        %v905 = vrcp.pop %v875
        %v906 = vrcp.pop %v877
        %v907 = vrcp.pop %v879
        %v908 = vrcp.pop %v881
        %v909 = vrcp.pop %v883
        %v910 = vrcp.pop %v885
        %v911 = vrcp.pop %v887
        %v912 = vrcp.pop %v889
        %v913 = vrcp.pop %v891
        %v914 = vrcp.pop %v893
        %v915 = vrcp.pop %v895
        %v916 = vrcp.pop %v897
        %v917 = vrcp.pop %v899
        %v918 = vrcp.pop %v901
        %v919 = vrcp.pop %v903
        %v920 = vmul.f32 %v841, %v904
        %v921 = vmul.f32 %v843, %v905
        %v922 = vmul.f32 %v845, %v906
        %v923 = vmul.f32 %v847, %v907
        %v924 = vmul.f32 %v849, %v908
        %v925 = vmul.f32 %v851, %v909
        %v926 = vmul.f32 %v853, %v910
        %v927 = vmul.f32 %v855, %v911
        %v928 = vmul.f32 %v857, %v912
        %v929 = vmul.f32 %v859, %v913
        %v930 = vmul.f32 %v861, %v914
        %v931 = vmul.f32 %v863, %v915
        %v932 = vmul.f32 %v865, %v916
        %v933 = vmul.f32 %v867, %v917
        %v934 = vmul.f32 %v869, %v918
        %v935 = vmul.f32 %v871, %v919
        %936 = vmatprep.subr.mxu0 0.0
        %937 = vmatpush1.msra.mxu0 %v920
        %938 = vmatprep.subr.mxu0 0.0
        %939 = vmatpush1.msra.mxu0 %v921
        %940 = vmatprep.subr.mxu0 0.0
        %941 = vmatpush1.msra.mxu0 %v922
        %942 = vmatprep.subr.mxu0 0.0
        %943 = vmatpush1.msra.mxu0 %v923
        %944 = vmatprep.subr.mxu0 0.0
        %945 = vmatpush1.msra.mxu0 %v924
        %946 = vmatprep.subr.mxu0 0.0
        %947 = vmatpush1.msra.mxu0 %v925
        %948 = vmatprep.subr.mxu0 0.0
        %949 = vmatpush1.msra.mxu0 %v926
        %950 = vmatprep.subr.mxu0 0.0
        %951 = vmatpush1.msra.mxu0 %v927
        %952 = vmatprep.subr.mxu0 0.0
        %953 = vmatpush1.msra.mxu0 %v928
        %954 = vmatprep.subr.mxu0 0.0
        %955 = vmatpush1.msra.mxu0 %v929
        %956 = vmatprep.subr.mxu0 0.0
        %957 = vmatpush1.msra.mxu0 %v930
        %958 = vmatprep.subr.mxu0 0.0
        %959 = vmatpush1.msra.mxu0 %v931
        %960 = vmatprep.subr.mxu0 0.0
        %961 = vmatpush1.msra.mxu0 %v932
        %962 = vmatprep.subr.mxu0 0.0
        %963 = vmatpush1.msra.mxu0 %v933
        %964 = vmatprep.subr.mxu0 0.0
        %965 = vmatpush1.msra.mxu0 %v934
        %966 = vmatprep.subr.mxu0 0.0
        %967 = vmatpush1.msra.mxu0 %v935
        %968 = vmatprep.subr.mxu0 0.0
        %969 = vmatpush1.msra.mxu0 0.0
        %970 = vmatprep.subr.mxu0 0.0
        %971 = vmatpush1.msra.mxu0 0.0
        %972 = vmatprep.subr.mxu0 0.0
        %973 = vmatpush1.msra.mxu0 0.0
        %974 = vmatprep.subr.mxu0 0.0
        %975 = vmatpush1.msra.mxu0 0.0
        %976 = vmatprep.subr.mxu0 0.0
        %977 = vmatpush1.msra.mxu0 0.0
        %978 = vmatprep.subr.mxu0 0.0
        %979 = vmatpush1.msra.mxu0 0.0
        %980 = vmatprep.subr.mxu0 0.0
        %981 = vmatpush1.msra.mxu0 0.0
        %982 = vmatprep.subr.mxu0 0.0
        %983 = vmatpush1.msra.mxu0 0.0
        %984 = vmatprep.subr.mxu0 0.0
        %985 = vmatpush1.msra.mxu0 0.0
        %986 = vmatprep.subr.mxu0 0.0
        %987 = vmatpush1.msra.mxu0 0.0
        %988 = vmatprep.subr.mxu0 0.0
        %989 = vmatpush1.msra.mxu0 0.0
        %990 = vmatprep.subr.mxu0 0.0
        %991 = vmatpush1.msra.mxu0 0.0
        %992 = vmatprep.subr.mxu0 0.0
        %993 = vmatpush1.msra.mxu0 0.0
        %994 = vmatprep.subr.mxu0 0.0
        %995 = vmatpush1.msra.mxu0 0.0
        %996 = vmatprep.subr.mxu0 0.0
        %997 = vmatpush1.msra.mxu0 0.0
        %998 = vmatprep.subr.mxu0 0.0
        %999 = vmatpush1.msra.mxu0 0.0
        %1000 = vmatprep.mubr.f32.mxu0 0.0
        %1001 = vmatmul.mubr.f32.gmra.mrb[0].mxu0 %v514
        %v1002 = vpop.f32.mrb[0].mxu0
        %v1003 = vadd.f32 0.0, %v1002
        %v1004 = vpop.f32.mrb[0].mxu0
        %1005 = vmatprep.mubr.f32.mxu0 0.0
        %1006 = vmatmul.mubr.f32.gmra.mrb[0].mxu0 %v519
        %v1007 = vpop.f32.mrb[0].mxu0
        %v1008 = vadd.f32 0.0, %v1007
        %v1009 = vpop.f32.mrb[0].mxu0
        %1010 = vmatprep.mubr.f32.mxu0 0.0
        %1011 = vmatmul.mubr.f32.gmra.mrb[0].mxu0 %v524
        %v1012 = vpop.f32.mrb[0].mxu0
        %v1013 = vadd.f32 0.0, %v1012
        %v1014 = vpop.f32.mrb[0].mxu0
        %1015 = vmatprep.mubr.f32.mxu0 0.0
        %1016 = vmatmul.mubr.f32.gmra.mrb[0].mxu0 %v529
        %v1017 = vpop.f32.mrb[0].mxu0
        %v1018 = vadd.f32 0.0, %v1017
        %v1019 = vpop.f32.mrb[0].mxu0
        %1020 = vmatprep.mubr.f32.mxu0 0.0
        %1021 = vmatmul.mubr.f32.gmra.mrb[0].mxu0 %v534
        %v1022 = vpop.f32.mrb[0].mxu0
        %v1023 = vadd.f32 0.0, %v1022
        %v1024 = vpop.f32.mrb[0].mxu0
        %1025 = vmatprep.mubr.f32.mxu0 0.0
        %1026 = vmatmul.mubr.f32.gmra.mrb[0].mxu0 %v539
        %v1027 = vpop.f32.mrb[0].mxu0
        %v1028 = vadd.f32 0.0, %v1027
        %v1029 = vpop.f32.mrb[0].mxu0
        %1030 = vmatprep.mubr.f32.mxu0 0.0
        %1031 = vmatmul.mubr.f32.gmra.mrb[0].mxu0 %v544
        %v1032 = vpop.f32.mrb[0].mxu0
        %v1033 = vadd.f32 0.0, %v1032
        %v1034 = vpop.f32.mrb[0].mxu0
        %1035 = vmatprep.mubr.f32.mxu0 0.0
        %1036 = vmatmul.mubr.f32.gmra.mrb[0].mxu0 %v549
        %v1037 = vpop.f32.mrb[0].mxu0
        %v1038 = vadd.f32 0.0, %v1037
        %v1039 = vpop.f32.mrb[0].mxu0
        %1040 = vmatprep.mubr.f32.mxu0 0.0
        %1041 = vmatmul.mubr.f32.gmra.mrb[0].mxu0 %v554
        %v1042 = vpop.f32.mrb[0].mxu0
        %v1043 = vadd.f32 0.0, %v1042
        %v1044 = vpop.f32.mrb[0].mxu0
        %1045 = vdwg.mxu0
        %v1046 = vadd.f32 %v1043, 1e-09
        %v1047 = vrcp.pop %v1046
        %v1048 = vlaneseq
        %v1049 = vshrl.u32 %v1048, 7
        %v1050 = vsub.s32 0, %v1049
        %v1051 = vrot.slane %v1047, %v1050
        %v1052 = vmul.f32 %v1003, %v1051
        %v1053 = vmul.f32 %v1008, %v1051
        %v1054 = vmul.f32 %v1013, %v1051
        %v1055 = vmul.f32 %v1018, %v1051
        %v1056 = vmul.f32 %v1023, %v1051
        %v1057 = vmul.f32 %v1028, %v1051
        %v1058 = vmul.f32 %v1033, %v1051
        %v1059 = vmul.f32 %v1038, %v1051
        %v1060 = vld [vmem:[%s4] sm:$0xff]
        %v1061 = vld [vmem:[%s4 + $0x8] sm:$0xff]
        %v1062 = vld [vmem:[%s4 + $0x10] sm:$0xff]
        %v1063 = vld [vmem:[%s4 + $0x18] sm:$0xff]
        %v1064 = vld [vmem:[%s4 + $0x20] sm:$0xff]
        %v1065 = vld [vmem:[%s4 + $0x28] sm:$0xff]
        %v1066 = vld [vmem:[%s4 + $0x30] sm:$0xff]
        %v1067 = vld [vmem:[%s4 + $0x38] sm:$0xff]
        %v1068 = vsub.f32 %v318, %v1052
        %v1069 = vsub.f32 %v319, %v1053
        %v1070 = vsub.f32 %v320, %v1054
        %v1071 = vsub.f32 %v321, %v1055
        %v1072 = vsub.f32 %v322, %v1056
        %v1073 = vsub.f32 %v323, %v1057
        %v1074 = vsub.f32 %v324, %v1058
        %v1075 = vsub.f32 %v325, %v1059
        %v1076 = vld [vmem:[%s5] sm:$0xff]
        %v1077 = vld [vmem:[%s5 + $0x8] sm:$0xff]
        %v1078 = vld [vmem:[%s5 + $0x10] sm:$0xff]
        %v1079 = vld [vmem:[%s5 + $0x18] sm:$0xff]
        %v1080 = vld [vmem:[%s5 + $0x20] sm:$0xff]
        %v1081 = vld [vmem:[%s5 + $0x28] sm:$0xff]
        %v1082 = vld [vmem:[%s5 + $0x30] sm:$0xff]
        %v1083 = vld [vmem:[%s5 + $0x38] sm:$0xff]
        %1085 = vset.pattern.permute.xlu0 0
        %1086 = vperm.xlu0 %1085, %v1076
        %v1087 = vpop.permute.xlu0 %1086
        %1090 = vset.pattern.permute.xlu0 0
        %1091 = vperm.xlu0 %1090, %v1077
        %v1092 = vpop.permute.xlu0 %1091
        %1095 = vset.pattern.permute.xlu0 0
        %1096 = vperm.xlu0 %1095, %v1078
        %v1097 = vpop.permute.xlu0 %1096
        %1100 = vset.pattern.permute.xlu0 0
        %1101 = vperm.xlu0 %1100, %v1079
        %v1102 = vpop.permute.xlu0 %1101
        %1105 = vset.pattern.permute.xlu0 0
        %1106 = vperm.xlu0 %1105, %v1080
        %v1107 = vpop.permute.xlu0 %1106
        %1110 = vset.pattern.permute.xlu0 0
        %1111 = vperm.xlu0 %1110, %v1081
        %v1112 = vpop.permute.xlu0 %1111
        %1115 = vset.pattern.permute.xlu0 0
        %1116 = vperm.xlu0 %1115, %v1082
        %v1117 = vpop.permute.xlu0 %1116
        %1120 = vset.pattern.permute.xlu0 0
        %1121 = vperm.xlu0 %1120, %v1083
        %v1122 = vpop.permute.xlu0 %1121
        %v1125 = vsel %vm403, %v1060, 0
        %v1128 = vsel %vm403, %v1061, 0
        %v1131 = vsel %vm403, %v1062, 0
        %v1134 = vsel %vm403, %v1063, 0
        %v1137 = vsel %vm403, %v1064, 0
        %v1140 = vsel %vm403, %v1065, 0
        %v1143 = vsel %vm403, %v1066, 0
        %v1146 = vsel %vm403, %v1067, 0
        %1148 = vmatprep.subr.mxu0 0.0
        %1149 = vmatpush1.msra.mxu0 %v1068
        %1150 = vmatprep.subr.mxu0 0.0
        %1151 = vmatpush1.msra.mxu0 %v1069
        %1152 = vmatprep.subr.mxu0 0.0
        %1153 = vmatpush1.msra.mxu0 %v1070
        %1154 = vmatprep.subr.mxu0 0.0
        %1155 = vmatpush1.msra.mxu0 %v1071
        %1156 = vmatprep.subr.mxu0 0.0
        %1157 = vmatpush1.msra.mxu0 %v1072
        %1158 = vmatprep.subr.mxu0 0.0
        %1159 = vmatpush1.msra.mxu0 %v1073
        %1160 = vmatprep.subr.mxu0 0.0
        %1161 = vmatpush1.msra.mxu0 %v1074
        %1162 = vmatprep.subr.mxu0 0.0
        %1163 = vmatpush1.msra.mxu0 %v1075
        %1164 = vmatprep.subr.mxu0 0.0
        %1165 = vmatpush1.msra.mxu0 0.0
        %1166 = vmatprep.subr.mxu0 0.0
        %1167 = vmatpush1.msra.mxu0 0.0
        %1168 = vmatprep.subr.mxu0 0.0
        %1169 = vmatpush1.msra.mxu0 0.0
        %1170 = vmatprep.subr.mxu0 0.0
        %1171 = vmatpush1.msra.mxu0 0.0
        %1172 = vmatprep.subr.mxu0 0.0
        %1173 = vmatpush1.msra.mxu0 0.0
        %1174 = vmatprep.subr.mxu0 0.0
        %1175 = vmatpush1.msra.mxu0 0.0
        %1176 = vmatprep.subr.mxu0 0.0
        %1177 = vmatpush1.msra.mxu0 0.0
        %1178 = vmatprep.subr.mxu0 0.0
        %1179 = vmatpush1.msra.mxu0 0.0
        %1180 = vmatprep.subr.mxu0 0.0
        %1181 = vmatpush1.msra.mxu0 0.0
        %1182 = vmatprep.subr.mxu0 0.0
        %1183 = vmatpush1.msra.mxu0 0.0
        %1184 = vmatprep.subr.mxu0 0.0
        %1185 = vmatpush1.msra.mxu0 0.0
        %1186 = vmatprep.subr.mxu0 0.0
        %1187 = vmatpush1.msra.mxu0 0.0
        %1188 = vmatprep.subr.mxu0 0.0
        %1189 = vmatpush1.msra.mxu0 0.0
        %1190 = vmatprep.subr.mxu0 0.0
        %1191 = vmatpush1.msra.mxu0 0.0
        %1192 = vmatprep.subr.mxu0 0.0
        %1193 = vmatpush1.msra.mxu0 0.0
        %1194 = vmatprep.subr.mxu0 0.0
        %1195 = vmatpush1.msra.mxu0 0.0
        %1196 = vmatprep.subr.mxu0 0.0
        %1197 = vmatpush1.msra.mxu0 0.0
        %1198 = vmatprep.subr.mxu0 0.0
        %1199 = vmatpush1.msra.mxu0 0.0
        %1200 = vmatprep.subr.mxu0 0.0
        %1201 = vmatpush1.msra.mxu0 0.0
        %1202 = vmatprep.subr.mxu0 0.0
        %1203 = vmatpush1.msra.mxu0 0.0
        %1204 = vmatprep.subr.mxu0 0.0
        %1205 = vmatpush1.msra.mxu0 0.0
        %1206 = vmatprep.subr.mxu0 0.0
        %1207 = vmatpush1.msra.mxu0 0.0
        %1208 = vmatprep.subr.mxu0 0.0
        %1209 = vmatpush1.msra.mxu0 0.0
        %1210 = vmatprep.subr.mxu0 0.0
        %1211 = vmatpush1.msra.mxu0 0.0
        %1212 = vmatprep.mubr.f32.mxu0 0.0
        %1213 = vmatmul.mubr.f32.gmra.mrb[0].mxu0 %v1125
        %v1214 = vpop.f32.mrb[0].mxu0
        %v1215 = vadd.f32 %v1087, %v1214
        %v1216 = vpop.f32.mrb[0].mxu0
        %1217 = vmatprep.mubr.f32.mxu0 0.0
        %1218 = vmatmul.mubr.f32.gmra.mrb[0].mxu0 %v1128
        %v1219 = vpop.f32.mrb[0].mxu0
        %v1220 = vadd.f32 %v1092, %v1219
        %v1221 = vpop.f32.mrb[0].mxu0
        %1222 = vmatprep.mubr.f32.mxu0 0.0
        %1223 = vmatmul.mubr.f32.gmra.mrb[0].mxu0 %v1131
        %v1224 = vpop.f32.mrb[0].mxu0
        %v1225 = vadd.f32 %v1097, %v1224
        %v1226 = vpop.f32.mrb[0].mxu0
        %1227 = vmatprep.mubr.f32.mxu0 0.0
        %1228 = vmatmul.mubr.f32.gmra.mrb[0].mxu0 %v1134
        %v1229 = vpop.f32.mrb[0].mxu0
        %v1230 = vadd.f32 %v1102, %v1229
        %v1231 = vpop.f32.mrb[0].mxu0
        %1232 = vmatprep.mubr.f32.mxu0 0.0
        %1233 = vmatmul.mubr.f32.gmra.mrb[0].mxu0 %v1137
        %v1234 = vpop.f32.mrb[0].mxu0
        %v1235 = vadd.f32 %v1107, %v1234
        %v1236 = vpop.f32.mrb[0].mxu0
        %1237 = vmatprep.mubr.f32.mxu0 0.0
        %1238 = vmatmul.mubr.f32.gmra.mrb[0].mxu0 %v1140
        %v1239 = vpop.f32.mrb[0].mxu0
        %v1240 = vadd.f32 %v1112, %v1239
        %v1241 = vpop.f32.mrb[0].mxu0
        %1242 = vmatprep.mubr.f32.mxu0 0.0
        %1243 = vmatmul.mubr.f32.gmra.mrb[0].mxu0 %v1143
        %v1244 = vpop.f32.mrb[0].mxu0
        %v1245 = vadd.f32 %v1117, %v1244
        %v1246 = vpop.f32.mrb[0].mxu0
        %1247 = vmatprep.mubr.f32.mxu0 0.0
        %1248 = vmatmul.mubr.f32.gmra.mrb[0].mxu0 %v1146
        %v1249 = vpop.f32.mrb[0].mxu0
        %v1250 = vadd.f32 %v1122, %v1249
        %v1251 = vpop.f32.mrb[0].mxu0
        %1252 = vdwg.mxu0
        %1253 = vadd.xlane.f32.xlu0 %v1215
        %v1254 = vpop.xlane.xlu0 %1253
        %1255 = vadd.xlane.f32.xlu0 %v1220
        %v1256 = vpop.xlane.xlu0 %1255
        %1257 = vadd.xlane.f32.xlu0 %v1225
        %v1258 = vpop.xlane.xlu0 %1257
        %1259 = vadd.xlane.f32.xlu0 %v1230
        %v1260 = vpop.xlane.xlu0 %1259
        %1261 = vadd.xlane.f32.xlu0 %v1235
        %v1262 = vpop.xlane.xlu0 %1261
        %1263 = vadd.xlane.f32.xlu0 %v1240
        %v1264 = vpop.xlane.xlu0 %1263
        %1265 = vadd.xlane.f32.xlu0 %v1245
        %v1266 = vpop.xlane.xlu0 %1265
        %1267 = vadd.xlane.f32.xlu0 %v1250
        %v1268 = vpop.xlane.xlu0 %1267
        %v1269 = vadd.f32 %v1254, %v1256
        %v1270 = vadd.f32 %v1269, %v1258
        %v1271 = vadd.f32 %v1270, %v1260
        %v1272 = vrot.slane %v1271, 4
        %v1273 = vadd.f32 %v1271, %v1272
        %v1274 = vrot.slane %v1273, 2
        %v1275 = vadd.f32 %v1273, %v1274
        %v1276 = vrot.slane %v1275, 1
        %v1277 = vadd.f32 %v1275, %v1276
        %v1278 = vadd.f32 %v1262, %v1264
        %v1279 = vadd.f32 %v1278, %v1266
        %v1280 = vadd.f32 %v1279, %v1268
        %v1281 = vrot.slane %v1280, 4
        %v1282 = vadd.f32 %v1280, %v1281
        %v1283 = vrot.slane %v1282, 2
        %v1284 = vadd.f32 %v1282, %v1283
        %v1285 = vrot.slane %v1284, 1
        %v1286 = vadd.f32 %v1284, %v1285
        %v1287 = vmul.f32 %v1277, 0.00024414063
        %v1288 = vmul.f32 %v1286, 0.00024414063
        %v1289 = vsub.f32 %v1215, %v1287
        %v1290 = vsub.f32 %v1220, %v1287
        %v1291 = vsub.f32 %v1225, %v1287
        %v1292 = vsub.f32 %v1230, %v1287
        %v1293 = vsub.f32 %v1235, %v1288
        %v1294 = vsub.f32 %v1240, %v1288
        %v1295 = vsub.f32 %v1245, %v1288
        %v1296 = vsub.f32 %v1250, %v1288
        %v1297 = vmul.f32 %v1289, %v1289
        %v1298 = vmul.f32 %v1290, %v1290
        %v1299 = vmul.f32 %v1291, %v1291
        %v1300 = vmul.f32 %v1292, %v1292
        %v1301 = vmul.f32 %v1293, %v1293
        %v1302 = vmul.f32 %v1294, %v1294
        %v1303 = vmul.f32 %v1295, %v1295
        %v1304 = vmul.f32 %v1296, %v1296
        %1305 = vadd.xlane.f32.xlu0 %v1297
        %v1306 = vpop.xlane.xlu0 %1305
        %1307 = vadd.xlane.f32.xlu0 %v1298
        %v1308 = vpop.xlane.xlu0 %1307
        %1309 = vadd.xlane.f32.xlu0 %v1299
        %v1310 = vpop.xlane.xlu0 %1309
        %1311 = vadd.xlane.f32.xlu0 %v1300
        %v1312 = vpop.xlane.xlu0 %1311
        %1313 = vadd.xlane.f32.xlu0 %v1301
        %v1314 = vpop.xlane.xlu0 %1313
        %1315 = vadd.xlane.f32.xlu0 %v1302
        %v1316 = vpop.xlane.xlu0 %1315
        %1317 = vadd.xlane.f32.xlu0 %v1303
        %v1318 = vpop.xlane.xlu0 %1317
        %1319 = vadd.xlane.f32.xlu0 %v1304
        %v1320 = vpop.xlane.xlu0 %1319
        %v1321 = vadd.f32 %v1306, %v1308
        %v1322 = vadd.f32 %v1321, %v1310
        %v1323 = vadd.f32 %v1322, %v1312
        %v1324 = vrot.slane %v1323, 4
        %v1325 = vadd.f32 %v1323, %v1324
        %v1326 = vrot.slane %v1325, 2
        %v1327 = vadd.f32 %v1325, %v1326
        %v1328 = vrot.slane %v1327, 1
        %v1329 = vadd.f32 %v1327, %v1328
        %v1330 = vadd.f32 %v1314, %v1316
        %v1331 = vadd.f32 %v1330, %v1318
        %v1332 = vadd.f32 %v1331, %v1320
        %v1333 = vrot.slane %v1332, 4
        %v1334 = vadd.f32 %v1332, %v1333
        %v1335 = vrot.slane %v1334, 2
        %v1336 = vadd.f32 %v1334, %v1335
        %v1337 = vrot.slane %v1336, 1
        %v1338 = vadd.f32 %v1336, %v1337
        %v1339 = vmul.f32 %v1329, 0.00024414063
        %v1340 = vmul.f32 %v1338, 0.00024414063
        %v1341 = vadd.f32 %v1339, 1e-05
        %v1342 = vadd.f32 %v1340, 1e-05
        %v1343 = vrsqrt.pop %v1341
        %v1344 = vrsqrt.pop %v1342
        %v1345 = vmul.f32 %v1289, %v1343
        %v1346 = vmul.f32 %v1290, %v1343
        %v1347 = vmul.f32 %v1291, %v1343
        %v1348 = vmul.f32 %v1292, %v1343
        %v1349 = vmul.f32 %v1293, %v1344
        %v1350 = vmul.f32 %v1294, %v1344
        %v1351 = vmul.f32 %v1295, %v1344
        %v1352 = vmul.f32 %v1296, %v1344
        %v1353 = vld [vmem:[%s6] sm:$0xff]
        %v1354 = vld [vmem:[%s6 + $0x8] sm:$0xff]
        %v1355 = vld [vmem:[%s6 + $0x10] sm:$0xff]
        %v1356 = vld [vmem:[%s6 + $0x18] sm:$0xff]
        %v1357 = vld [vmem:[%s6 + $0x20] sm:$0xff]
        %v1358 = vld [vmem:[%s6 + $0x28] sm:$0xff]
        %v1359 = vld [vmem:[%s6 + $0x30] sm:$0xff]
        %v1360 = vld [vmem:[%s6 + $0x38] sm:$0xff]
        %1362 = vset.pattern.permute.xlu0 0
        %1363 = vperm.xlu0 %1362, %v1353
        %v1364 = vpop.permute.xlu0 %1363
        %1367 = vset.pattern.permute.xlu0 0
        %1368 = vperm.xlu0 %1367, %v1354
        %v1369 = vpop.permute.xlu0 %1368
        %1372 = vset.pattern.permute.xlu0 0
        %1373 = vperm.xlu0 %1372, %v1355
        %v1374 = vpop.permute.xlu0 %1373
        %1377 = vset.pattern.permute.xlu0 0
        %1378 = vperm.xlu0 %1377, %v1356
        %v1379 = vpop.permute.xlu0 %1378
        %1382 = vset.pattern.permute.xlu0 0
        %1383 = vperm.xlu0 %1382, %v1357
        %v1384 = vpop.permute.xlu0 %1383
        %1387 = vset.pattern.permute.xlu0 0
        %1388 = vperm.xlu0 %1387, %v1358
        %v1389 = vpop.permute.xlu0 %1388
        %1392 = vset.pattern.permute.xlu0 0
        %1393 = vperm.xlu0 %1392, %v1359
        %v1394 = vpop.permute.xlu0 %1393
        %1397 = vset.pattern.permute.xlu0 0
        %1398 = vperm.xlu0 %1397, %v1360
        %v1399 = vpop.permute.xlu0 %1398
        %v1401 = vmul.f32 %v1345, %v1364
        %v1402 = vmul.f32 %v1346, %v1369
        %v1403 = vmul.f32 %v1347, %v1374
        %v1404 = vmul.f32 %v1348, %v1379
        %v1405 = vmul.f32 %v1349, %v1384
        %v1406 = vmul.f32 %v1350, %v1389
        %v1407 = vmul.f32 %v1351, %v1394
        %v1408 = vmul.f32 %v1352, %v1399
        %v1409 = vld [vmem:[%s7] sm:$0xff]
        %v1410 = vld [vmem:[%s7 + $0x8] sm:$0xff]
        %v1411 = vld [vmem:[%s7 + $0x10] sm:$0xff]
        %v1412 = vld [vmem:[%s7 + $0x18] sm:$0xff]
        %v1413 = vld [vmem:[%s7 + $0x20] sm:$0xff]
        %v1414 = vld [vmem:[%s7 + $0x28] sm:$0xff]
        %v1415 = vld [vmem:[%s7 + $0x30] sm:$0xff]
        %v1416 = vld [vmem:[%s7 + $0x38] sm:$0xff]
        %1418 = vset.pattern.permute.xlu0 0
        %1419 = vperm.xlu0 %1418, %v1409
        %v1420 = vpop.permute.xlu0 %1419
        %1423 = vset.pattern.permute.xlu0 0
        %1424 = vperm.xlu0 %1423, %v1410
        %v1425 = vpop.permute.xlu0 %1424
        %1428 = vset.pattern.permute.xlu0 0
        %1429 = vperm.xlu0 %1428, %v1411
        %v1430 = vpop.permute.xlu0 %1429
        %1433 = vset.pattern.permute.xlu0 0
        %1434 = vperm.xlu0 %1433, %v1412
        %v1435 = vpop.permute.xlu0 %1434
        %1438 = vset.pattern.permute.xlu0 0
        %1439 = vperm.xlu0 %1438, %v1413
        %v1440 = vpop.permute.xlu0 %1439
        %1443 = vset.pattern.permute.xlu0 0
        %1444 = vperm.xlu0 %1443, %v1414
        %v1445 = vpop.permute.xlu0 %1444
        %1448 = vset.pattern.permute.xlu0 0
        %1449 = vperm.xlu0 %1448, %v1415
        %v1450 = vpop.permute.xlu0 %1449
        %1453 = vset.pattern.permute.xlu0 0
        %1454 = vperm.xlu0 %1453, %v1416
        %v1455 = vpop.permute.xlu0 %1454
        %v1457 = vadd.f32 %v1401, %v1420
        %v1458 = vadd.f32 %v1402, %v1425
        %v1459 = vadd.f32 %v1403, %v1430
        %v1460 = vadd.f32 %v1404, %v1435
        %v1461 = vadd.f32 %v1405, %v1440
        %v1462 = vadd.f32 %v1406, %v1445
        %v1463 = vadd.f32 %v1407, %v1450
        %v1464 = vadd.f32 %v1408, %v1455
        %v1465 = vmax.f32 %v1457, 0.0
        %v1466 = vmax.f32 %v1458, 0.0
        %v1467 = vmax.f32 %v1459, 0.0
        %v1468 = vmax.f32 %v1460, 0.0
        %v1469 = vmax.f32 %v1461, 0.0
        %v1470 = vmax.f32 %v1462, 0.0
        %v1471 = vmax.f32 %v1463, 0.0
        %v1472 = vmax.f32 %v1464, 0.0
        %v1473 = vadd.f32 %v318, %v1465
        %v1474 = vadd.f32 %v319, %v1466
        %v1475 = vadd.f32 %v320, %v1467
        %v1476 = vadd.f32 %v321, %v1468
        %v1477 = vadd.f32 %v322, %v1469
        %v1478 = vadd.f32 %v323, %v1470
        %v1479 = vadd.f32 %v324, %v1471
        %v1480 = vadd.f32 %v325, %v1472
        %1481 = vst [vmem:[%s309] sm:$0xff] %v1473
        %1482 = vst [vmem:[%s309 + $0x8] sm:$0xff] %v1474
        %1483 = vst [vmem:[%s309 + $0x10] sm:$0xff] %v1475
        %1484 = vst [vmem:[%s309 + $0x18] sm:$0xff] %v1476
        %1485 = vst [vmem:[%s309 + $0x20] sm:$0xff] %v1477
        %1486 = vst [vmem:[%s309 + $0x28] sm:$0xff] %v1478
        %1487 = vst [vmem:[%s309 + $0x30] sm:$0xff] %v1479
        %1488 = vst [vmem:[%s309 + $0x38] sm:$0xff] %v1480
        %s1489 = sand.u32 %s208, 1
        %s1490 = scalar_lea.sflag [#allocation3], %s1489
        %s1491 = sand.u32 %s208, 1
        %s1492 = smul.addr %s1491, 64
        %s1493 = scalar_lea.vmem [#allocation2], %s1492
        // Predicated region
        $region53: #{tpu_custom_call.1} parent=51 // pred_check
          %p1494 = pneg %p218
        $region54: #{tpu_custom_call.1} parent=51 // pred_check_branch
          %1496 = sbr.rel (%p1494) target = $region56
        $region55: #{tpu_custom_call.1} parent=51 // pred_region
          %s1498 = ssub.s32 1024, 1024
          %1499 = vsyncadd %s1490, %s1498
          %s1500 = smul.addr %s22, 8
          %s1501 = smul.addr %s1500, 128
          %s1502 = scalar_lea.hbm %s8, %s1501
          %s1503 = sshll.u32 %s1493, 4
          %s1504 = int_to_ptr.vmem [resolvable:$true] %s1503
          %1509 = dma.vmem_to_hbm [thread:$0]  %s1504, 1024, %s1502, %s1490, 128, 128, 8
        $region56: #{tpu_custom_call.1} parent=51 // pred_fallthru
          _
      $region52: #{tpu_custom_call.1} parent=5 // pred_fallthru
        _
      %p1510 = scmp.le.s32.totalorder 2, %s17
      // Predicated region
      $region57: #{tpu_custom_call.1} parent=5 // pred_check
        %p1511 = pneg %p1510
      $region58: #{tpu_custom_call.1} parent=5 // pred_check_branch
        %1513 = sbr.rel (%p1511) target = $region60
      $region59: #{tpu_custom_call.1} parent=5 // pred_region
        %s1514 = ssub.s32 %s17, 2
        // Predicated region
        $region61: #{tpu_custom_call.1} parent=59 // pred_check
          %p1515 = pneg %p224
        $region62: #{tpu_custom_call.1} parent=59 // pred_check_branch
          %1517 = sbr.rel (%p1515) target = $region64
        $region63: #{tpu_custom_call.1} parent=59 // pred_region
          %s1518 = sand.u32 %s209, 1
          %s1519 = scalar_lea.sflag [#allocation3], %s1518
          %s1520 = sand.u32 %s209, 1
          %s1521 = smul.addr %s1520, 64
          %s1522 = scalar_lea.vmem [#allocation2], %s1521
          %1523 = dma.done %s1519, 1024
        $region64: #{tpu_custom_call.1} parent=59 // pred_fallthru
          _
      $region60: #{tpu_custom_call.1} parent=5 // pred_fallthru
        _
    $region6: #{tpu_custom_call.1} parent=1 // loop_footer
      %s21 = sadd.s32 1, %s17
    $region7: #{tpu_custom_call.1} parent=1 // loop_footer_branch
      %16 = sbr.rel target = $region3
    $region8: #{tpu_custom_call.1} parent=1 // loop_exit
      _
    %1524 = vsyncpa [#allocation3], 1
    %s1525 = scalar_lea.sflag [#allocation3], 1
    %1526 = vsyncpa %s1525, 1

</llo_original>
